<compile_context>
chip_gen: v6e
topology: v6e:2x2x1
jax: 0.10.0
libtpu: 0.0.40
codegen_flags: <defaults>
</compile_context>

<pallas_src>
import functools
import math

import jax
import jax.numpy as jnp
from jax.experimental import pallas as pl
from jax.experimental.pallas import tpu as pltpu


# ----------------------------- in-kernel helpers -----------------------------

def _layernorm(x, w, b, eps):
    # x: (rows, E), w/b: (1, E); all f32
    mu = jnp.mean(x, axis=-1, keepdims=True)
    var = jnp.mean((x - mu) ** 2, axis=-1, keepdims=True)
    return (x - mu) * jax.lax.rsqrt(var + eps) * w + b


# ----------------------------- fused whole-model kernel -----------------------------

def fused_transformer_kernel(onehot_ref, emb_ref, w_ref, b_ref, head_ref, o_ref, *,
                             N, S, E, F, nhead, num_layers, d_out, eps, head_eps):
    NS = N * S
    HS = nhead * S
    bf16 = jnp.bfloat16

    # constants precomputed host-side and packed into the head slab (no per-call iota/compare)
    kmask = head_ref[8 + E:8 + E + HS, 0:E]               # (HS, E): 1 where col-head == row-head
    bones = head_ref[8 + E + HS:8 + E + 2 * HS, 0:HS]     # (HS, HS): block-diagonal ones

    # ---- embedding lookup: host-built one-hot x VMEM-resident table, on the MXU ----
    x = jnp.dot(onehot_ref[...], emb_ref[...], preferred_element_type=jnp.float32)   # (NS, E)

    # ---- encoder layers (post-norm), statically unrolled; slab-resident weights ----
    for li in range(num_layers):
        # static, sublane-aligned slices of the stacked weight / bias slabs
        wq = w_ref[li, 0 * E:1 * E, 0:E]          # (E, E) bf16, softmax scale pre-folded
        wk = w_ref[li, 1 * E:2 * E, 0:E]
        wv = w_ref[li, 2 * E:3 * E, 0:E]
        wo = w_ref[li, 3 * E:4 * E, 0:E]
        w1 = w_ref[li, 4 * E:5 * E, 0:F]          # (E, F)
        w2 = w_ref[li, 5 * E:5 * E + F, 0:E]      # (F, E)
        bq = b_ref[li, 0:1, 0:E]
        bk = b_ref[li, 1:2, 0:E]
        bv = b_ref[li, 2:3, 0:E]
        bo = b_ref[li, 3:4, 0:E]
        b1 = b_ref[li, 4:5, 0:F]
        b2 = b_ref[li, 5:6, 0:E]
        n1w = b_ref[li, 6:7, 0:E]
        n1b = b_ref[li, 7:8, 0:E]
        n2w = b_ref[li, 8:9, 0:E]
        n2b = b_ref[li, 9:10, 0:E]

        # three aligned (E,E) projections (bf16 in, f32 accumulate)
        xb = x.astype(bf16)
        q = jnp.dot(xb, wq, preferred_element_type=jnp.float32) + bq                 # (NS, E)
        k = jnp.dot(xb, wk, preferred_element_type=jnp.float32) + bk
        v = jnp.dot(xb, wv, preferred_element_type=jnp.float32) + bv

        q3 = q.reshape(N, S, E)
        k3 = k.reshape(N, S, E)
        v3 = v.reshape(N, S, E)

        # replicate K/V over heads along the sequence axis and zero out the "wrong-head" features
        ktile = jnp.concatenate([k3] * nhead, axis=1) * kmask                        # (N, HS, E)
        vtile = jnp.concatenate([v3] * nhead, axis=1) * kmask                        # (N, HS, E)

        # all-head scores in one 3-D einsum: s[n, q, h*S + j] = <q_h[n,q], k_h[n,j]> (pre-scaled)
        s = jnp.einsum("nqe,nje->nqj", q3, ktile, preferred_element_type=jnp.float32)  # (N,S,HS)
        s = s - jnp.max(s, axis=-1, keepdims=True)    # global row shift == valid per-head shift
        p = jnp.exp(s).reshape(NS, HS)
        denom = jnp.dot(p, bones, preferred_element_type=jnp.float32)  # per-head sums, broadcast
        p = (p * pl.reciprocal(denom, approx=True)).reshape(N, S, HS)

        attn = jnp.einsum("nqj,nje->nqe", p, vtile,
                          preferred_element_type=jnp.float32).reshape(NS, E)
        attn = jnp.dot(attn.astype(bf16), wo, preferred_element_type=jnp.float32) + bo

        # dropout1 = identity (inference)
        x = _layernorm(x + attn, n1w, n1b, eps)

        ff = jnp.dot(x.astype(bf16), w1, preferred_element_type=jnp.float32) + b1
        ff = jnp.maximum(ff, 0.0)                 # relu; inner dropout = identity
        ff = jnp.dot(ff.astype(bf16), w2, preferred_element_type=jnp.float32) + b2
        x = _layernorm(x + ff, n2w, n2b, eps)

    # ---- head: final encoder LayerNorm, mean pool, mlp_head LayerNorm+Linear, tanh ----
    x = _layernorm(x, head_ref[0:1, 0:E], head_ref[1:2, 0:E], eps)                   # (NS, E)
    m = jnp.mean(x.reshape(N, S, E), axis=1)                                         # (N, E)
    m = _layernorm(m, head_ref[2:3, 0:E], head_ref[3:4, 0:E], head_eps)

    hl_b = head_ref[4:5, 0:d_out]
    hl_w = head_ref[8:8 + E, 0:d_out]
    o_ref[...] = jnp.tanh(jnp.dot(m, hl_w, preferred_element_type=jnp.float32) + hl_b)


# ----------------------------- host-side slab packing -----------------------------

def _padc(a, cols):
    return jnp.pad(a, ((0, 0), (0, cols - a.shape[1])))


def _prep_slabs(params, *, nhead, seq_len):
    emb = params["emb"]
    E = emb.shape[1]
    Dh = E // nhead
    scale = 1.0 / math.sqrt(Dh)
    layers = params["layers"]
    F = layers[0]["l1_w"].shape[0]
    S = seq_len
    HS = nhead * S

    WC = max(E, F)
    w_rows, b_rows = [], []
    for lp in layers:
        wq_t = lp["in_w"][0:E].T * scale           # scale folded into Wq / bq
        wk_t = lp["in_w"][E:2 * E].T
        wv_t = lp["in_w"][2 * E:3 * E].T
        w_rows.append(jnp.concatenate(
            [_padc(wq_t, WC), _padc(wk_t, WC), _padc(wv_t, WC),
             _padc(lp["out_w"].T, WC), _padc(lp["l1_w"].T, WC), _padc(lp["l2_w"].T, WC)],
            axis=0))                               # (5E + F, WC)
        b_rows.append(jnp.concatenate(
            [_padc(lp["in_b"][:, 0:E] * scale, WC),
             _padc(lp["in_b"][:, E:2 * E], WC),
             _padc(lp["in_b"][:, 2 * E:3 * E], WC),
             _padc(lp["out_b"], WC),
             _padc(lp["l1_b"], WC),
             _padc(lp["l2_b"], WC),
             _padc(lp["n1_w"], WC), _padc(lp["n1_b"], WC),
             _padc(lp["n2_w"], WC), _padc(lp["n2_b"], WC)], axis=0))   # (10, WC)

    w_slab = jnp.stack(w_rows, axis=0).astype(jnp.bfloat16)            # (L, 5E+F, WC) bf16
    b_slab = jnp.stack(b_rows, axis=0)                                 # (L, 10, WC)  f32

    hp = params["head"]
    d_out = hp["hl_w"].shape[0]
    HC = max(E, HS, d_out)

    vec = jnp.concatenate([_padc(hp["en_w"], HC), _padc(hp["en_b"], HC),
                           _padc(hp["hn_w"], HC), _padc(hp["hn_b"], HC),
                           _padc(hp["hl_b"], HC)], axis=0)             # rows 0..4
    vec = jnp.pad(vec, ((0, 8 - vec.shape[0]), (0, 0)))                # pad to 8 rows (aligned)
    hl_w = _padc(hp["hl_w"].T, HC)                                     # (E, HC)

    # constant attention masks (built once at prep time, not per kernel call)
    kmask = ((jnp.arange(E)[None, :] // Dh) ==
             (jnp.arange(HS)[:, None] // S)).astype(jnp.float32)       # (HS, E)
    bones = ((jnp.arange(HS)[None, :] // S) ==
             (jnp.arange(HS)[:, None] // S)).astype(jnp.float32)       # (HS, HS)

    head_slab = jnp.concatenate([vec, hl_w, _padc(kmask, HC), _padc(bones, HC)], axis=0)
    return w_slab, b_slab, head_slab


# ----------------------------- model forward (single pallas_call) -----------------------------

def transformer_syn_forward(params, text, *, nhead, layer_norm_eps, d_out):
    N, S = text.shape
    emb = params["emb"]
    obs_size, E = emb.shape
    num_layers = len(params["layers"])
    F = params["layers"][0]["l1_w"].shape[0]

    w_slab, b_slab, head_slab = _prep_slabs(params, nhead=nhead, seq_len=S)
    onehot = (text.reshape(-1, 1) ==
              jnp.arange(obs_size, dtype=text.dtype)[None, :]).astype(jnp.float32)   # (N*S, V)

    kernel = functools.partial(
        fused_transformer_kernel, N=N, S=S, E=E, F=F, nhead=nhead,
        num_layers=num_layers, d_out=d_out, eps=layer_norm_eps, head_eps=1e-5)

    inputs = (onehot, emb, w_slab, b_slab, head_slab)    # 5 inputs (was ~22)
    return pl.pallas_call(
        kernel,
        out_shape=jax.ShapeDtypeStruct((N, d_out), jnp.float32),
        in_specs=[pl.BlockSpec(memory_space=pltpu.MemorySpace.VMEM)] * len(inputs),
        out_specs=pl.BlockSpec(memory_space=pltpu.MemorySpace.VMEM),
    )(*inputs)


# ----------------------------- parameter construction -----------------------------

def init_params(key, *, obs_size, d_model, d_out, dim_ff, num_layers):
    def nrm(k, shape, scale):
        return scale * jax.random.normal(k, shape, dtype=jnp.float32)

    keys = jax.random.split(key, 2 + num_layers)
    params = {"emb": nrm(keys[0], (obs_size, d_model), d_model ** -0.5)}

    layers = []
    for li in range(num_layers):
        lk = jax.random.split(keys[1 + li], 8)
        layers.append({
            "in_w": nrm(lk[0], (3 * d_model, d_model), 0.1),
            "in_b": nrm(lk[1], (1, 3 * d_model), 0.01),
            "out_w": nrm(lk[2], (d_model, d_model), 0.1),
            "out_b": nrm(lk[3], (1, d_model), 0.01),
            "n1_w": jnp.ones((1, d_model), jnp.float32),
            "n1_b": jnp.zeros((1, d_model), jnp.float32),
            "n2_w": jnp.ones((1, d_model), jnp.float32),
            "n2_b": jnp.zeros((1, d_model), jnp.float32),
            "l1_w": nrm(lk[4], (dim_ff, d_model), 0.1),
            "l1_b": nrm(lk[5], (1, dim_ff), 0.01),
            "l2_w": nrm(lk[6], (d_model, dim_ff), 0.1),
            "l2_b": nrm(lk[7], (1, d_model), 0.01),
        })
    params["layers"] = layers

    hk = jax.random.split(keys[1 + num_layers], 2)
    params["head"] = {
        "en_w": jnp.ones((1, d_model), jnp.float32),
        "en_b": jnp.zeros((1, d_model), jnp.float32),
        "hn_w": jnp.ones((1, d_model), jnp.float32),
        "hn_b": jnp.zeros((1, d_model), jnp.float32),
        "hl_w": nrm(hk[0], (d_out, d_model), 0.1),
        "hl_b": nrm(hk[1], (1, d_out), 0.01),
    }
    return params


# ----------------------------- pure-JAX reference (sanity check) -----------------------------

def _ref_forward(params, text, *, nhead, layer_norm_eps, d_out):
    def ln(x, w, b, eps):
        mu = x.mean(-1, keepdims=True)
        var = ((x - mu) ** 2).mean(-1, keepdims=True)
        return (x - mu) / jnp.sqrt(var + eps) * w + b

    x = jnp.take(params["emb"], text, axis=0)
    N, S, E = x.shape
    Dh = E // nhead
    for lp in params["layers"]:
        q = x @ lp["in_w"][0:E].T + lp["in_b"][0, 0:E]
        k = x @ lp["in_w"][E:2 * E].T + lp["in_b"][0, E:2 * E]
        v = x @ lp["in_w"][2 * E:].T + lp["in_b"][0, 2 * E:]
        q = q.reshape(N, S, nhead, Dh).transpose(0, 2, 1, 3)
        k = k.reshape(N, S, nhead, Dh).transpose(0, 2, 1, 3)
        v = v.reshape(N, S, nhead, Dh).transpose(0, 2, 1, 3)
        s = jnp.einsum("bhqd,bhkd->bhqk", q, k) / math.sqrt(Dh)
        p = jax.nn.softmax(s, axis=-1)
        a = jnp.einsum("bhqk,bhkd->bhqd", p, v).transpose(0, 2, 1, 3).reshape(N, S, E)
        a = a @ lp["out_w"].T + lp["out_b"][0]
        x1 = ln(x + a, lp["n1_w"][0], lp["n1_b"][0], layer_norm_eps)
        ff = jax.nn.relu(x1 @ lp["l1_w"].T + lp["l1_b"][0]) @ lp["l2_w"].T + lp["l2_b"][0]
        x = ln(x1 + ff, lp["n2_w"][0], lp["n2_b"][0], layer_norm_eps)
    hp = params["head"]
    x = ln(x, hp["en_w"][0], hp["en_b"][0], layer_norm_eps)
    m = x.mean(axis=1)
    m = ln(m, hp["hn_w"][0], hp["hn_b"][0], 1e-5)
    return jnp.tanh(m @ hp["hl_w"].T + hp["hl_b"][0])


# ----------------------------- main -----------------------------

if __name__ == "__main__":
    obs_size = 16
    d_model = 32
    d_out = 8
    nhead = 4
    num_encoder_layers = 2
    dim_ff = 64
    layer_norm_eps = 1e-5
    N, S = 2, 8

    key = jax.random.PRNGKey(0)
    pkey, tkey = jax.random.split(key)
    params = init_params(pkey, obs_size=obs_size, d_model=d_model, d_out=d_out,
                         dim_ff=dim_ff, num_layers=num_encoder_layers)
    text = jax.random.randint(tkey, (N, S), 0, obs_size, dtype=jnp.int32)

    out = transformer_syn_forward(params, text, nhead=nhead,
                                  layer_norm_eps=layer_norm_eps, d_out=d_out)
    out = jax.block_until_ready(out)

    ref = _ref_forward(params, text, nhead=nhead,
                       layer_norm_eps=layer_norm_eps, d_out=d_out)
    assert out.shape == (N, d_out)
    assert bool(jnp.all(jnp.isfinite(out)))
    assert bool(jnp.max(jnp.abs(out - ref)) < 5e-2), "kernel diverges from reference"

    print("KERNEL_OK")
</pallas_src>

<mosaic_0001>
module attributes {stable_mosaic.version = 11 : i64} {
  func.func @fused_transformer_kernel(%arg0: memref<16x16xf32, #tpu.memory_space<vmem>>, %arg1: memref<16x32xf32, #tpu.memory_space<vmem>>, %arg2: memref<2x224x64xbf16, #tpu.memory_space<vmem>>, %arg3: memref<2x10x64xf32, #tpu.memory_space<vmem>>, %arg4: memref<104x32xf32, #tpu.memory_space<vmem>>, %arg5: memref<2x8xf32, #tpu.memory_space<vmem>>) attributes {dimension_semantics = [], scalar_prefetch = 0 : i64, scratch_operands = 0 : i64, tpu.core_type = #tpu.core_type<tc>} {
    %c40 = arith.constant 40 : index
    %c0 = arith.constant 0 : index
    %0 = vector.load %arg4[%c40, %c0] : memref<104x32xf32, #tpu.memory_space<vmem>>, vector<32x32xf32>
    %c72 = arith.constant 72 : index
    %c0_0 = arith.constant 0 : index
    %1 = vector.load %arg4[%c72, %c0_0] : memref<104x32xf32, #tpu.memory_space<vmem>>, vector<32x32xf32>
    %c0_1 = arith.constant 0 : index
    %c0_2 = arith.constant 0 : index
    %2 = vector.load %arg0[%c0_1, %c0_2] : memref<16x16xf32, #tpu.memory_space<vmem>>, vector<16x16xf32>
    %c0_3 = arith.constant 0 : index
    %c0_4 = arith.constant 0 : index
    %3 = vector.load %arg1[%c0_3, %c0_4] : memref<16x32xf32, #tpu.memory_space<vmem>>, vector<16x32xf32>
    %cst = arith.constant dense<0.000000e+00> : vector<16x32xf32>
    %4 = tpu.matmul %2, %3, %cst {dimension_numbers = #tpu.dot_dimension_numbers<[1], [0], [0], [1], [0, 0, 1, 1], [], []>} : vector<16x16xf32>, vector<16x32xf32>, vector<16x32xf32> -> vector<16x32xf32>
    %c0_5 = arith.constant 0 : index
    %c0_6 = arith.constant 0 : index
    %c0_7 = arith.constant 0 : index
    %5 = vector.load %arg2[%c0_5, %c0_6, %c0_7] : memref<2x224x64xbf16, #tpu.memory_space<vmem>>, vector<1x32x32xbf16>
    %6 = vector.shape_cast %5 : vector<1x32x32xbf16> to vector<32x32xbf16>
    %c0_8 = arith.constant 0 : index
    %c32 = arith.constant 32 : index
    %c0_9 = arith.constant 0 : index
    %7 = vector.load %arg2[%c0_8, %c32, %c0_9] : memref<2x224x64xbf16, #tpu.memory_space<vmem>>, vector<1x32x32xbf16>
    %8 = vector.shape_cast %7 : vector<1x32x32xbf16> to vector<32x32xbf16>
    %c0_10 = arith.constant 0 : index
    %c64 = arith.constant 64 : index
    %c0_11 = arith.constant 0 : index
    %9 = vector.load %arg2[%c0_10, %c64, %c0_11] : memref<2x224x64xbf16, #tpu.memory_space<vmem>>, vector<1x32x32xbf16>
    %10 = vector.shape_cast %9 : vector<1x32x32xbf16> to vector<32x32xbf16>
    %c0_12 = arith.constant 0 : index
    %c96 = arith.constant 96 : index
    %c0_13 = arith.constant 0 : index
    %11 = vector.load %arg2[%c0_12, %c96, %c0_13] : memref<2x224x64xbf16, #tpu.memory_space<vmem>>, vector<1x32x32xbf16>
    %12 = vector.shape_cast %11 : vector<1x32x32xbf16> to vector<32x32xbf16>
    %c0_14 = arith.constant 0 : index
    %c128 = arith.constant 128 : index
    %c0_15 = arith.constant 0 : index
    %13 = vector.load %arg2[%c0_14, %c128, %c0_15] : memref<2x224x64xbf16, #tpu.memory_space<vmem>>, vector<1x32x64xbf16>
    %14 = vector.shape_cast %13 : vector<1x32x64xbf16> to vector<32x64xbf16>
    %c0_16 = arith.constant 0 : index
    %c160 = arith.constant 160 : index
    %c0_17 = arith.constant 0 : index
    %15 = vector.load %arg2[%c0_16, %c160, %c0_17] : memref<2x224x64xbf16, #tpu.memory_space<vmem>>, vector<1x64x32xbf16>
    %16 = vector.shape_cast %15 : vector<1x64x32xbf16> to vector<64x32xbf16>
    %c0_18 = arith.constant 0 : index
    %c0_19 = arith.constant 0 : index
    %c0_20 = arith.constant 0 : index
    %17 = vector.load %arg3[%c0_18, %c0_19, %c0_20] : memref<2x10x64xf32, #tpu.memory_space<vmem>>, vector<1x1x32xf32>
    %18 = vector.shape_cast %17 : vector<1x1x32xf32> to vector<1x32xf32>
    %c0_21 = arith.constant 0 : index
    %c1 = arith.constant 1 : index
    %c0_22 = arith.constant 0 : index
    %19 = vector.load %arg3[%c0_21, %c1, %c0_22] : memref<2x10x64xf32, #tpu.memory_space<vmem>>, vector<1x1x32xf32>
    %20 = vector.shape_cast %19 : vector<1x1x32xf32> to vector<1x32xf32>
    %c0_23 = arith.constant 0 : index
    %c2 = arith.constant 2 : index
    %c0_24 = arith.constant 0 : index
    %21 = vector.load %arg3[%c0_23, %c2, %c0_24] : memref<2x10x64xf32, #tpu.memory_space<vmem>>, vector<1x1x32xf32>
    %22 = vector.shape_cast %21 : vector<1x1x32xf32> to vector<1x32xf32>
    %c0_25 = arith.constant 0 : index
    %c3 = arith.constant 3 : index
    %c0_26 = arith.constant 0 : index
    %23 = vector.load %arg3[%c0_25, %c3, %c0_26] : memref<2x10x64xf32, #tpu.memory_space<vmem>>, vector<1x1x32xf32>
    %24 = vector.shape_cast %23 : vector<1x1x32xf32> to vector<1x32xf32>
    %c0_27 = arith.constant 0 : index
    %c4 = arith.constant 4 : index
    %c0_28 = arith.constant 0 : index
    %25 = vector.load %arg3[%c0_27, %c4, %c0_28] : memref<2x10x64xf32, #tpu.memory_space<vmem>>, vector<1x1x64xf32>
    %26 = vector.shape_cast %25 : vector<1x1x64xf32> to vector<1x64xf32>
    %c0_29 = arith.constant 0 : index
    %c5 = arith.constant 5 : index
    %c0_30 = arith.constant 0 : index
    %27 = vector.load %arg3[%c0_29, %c5, %c0_30] : memref<2x10x64xf32, #tpu.memory_space<vmem>>, vector<1x1x32xf32>
    %28 = vector.shape_cast %27 : vector<1x1x32xf32> to vector<1x32xf32>
    %c0_31 = arith.constant 0 : index
    %c6 = arith.constant 6 : index
    %c0_32 = arith.constant 0 : index
    %29 = vector.load %arg3[%c0_31, %c6, %c0_32] : memref<2x10x64xf32, #tpu.memory_space<vmem>>, vector<1x1x32xf32>
    %30 = vector.shape_cast %29 : vector<1x1x32xf32> to vector<1x32xf32>
    %c0_33 = arith.constant 0 : index
    %c7 = arith.constant 7 : index
    %c0_34 = arith.constant 0 : index
    %31 = vector.load %arg3[%c0_33, %c7, %c0_34] : memref<2x10x64xf32, #tpu.memory_space<vmem>>, vector<1x1x32xf32>
    %32 = vector.shape_cast %31 : vector<1x1x32xf32> to vector<1x32xf32>
    %c0_35 = arith.constant 0 : index
    %c8 = arith.constant 8 : index
    %c0_36 = arith.constant 0 : index
    %33 = vector.load %arg3[%c0_35, %c8, %c0_36] : memref<2x10x64xf32, #tpu.memory_space<vmem>>, vector<1x1x32xf32>
    %34 = vector.shape_cast %33 : vector<1x1x32xf32> to vector<1x32xf32>
    %c0_37 = arith.constant 0 : index
    %c9 = arith.constant 9 : index
    %c0_38 = arith.constant 0 : index
    %35 = vector.load %arg3[%c0_37, %c9, %c0_38] : memref<2x10x64xf32, #tpu.memory_space<vmem>>, vector<1x1x32xf32>
    %36 = vector.shape_cast %35 : vector<1x1x32xf32> to vector<1x32xf32>
    %37 = arith.truncf %4 : vector<16x32xf32> to vector<16x32xbf16>
    %cst_39 = arith.constant dense<0.000000e+00> : vector<16x32xf32>
    %38 = tpu.matmul %37, %6, %cst_39 {dimension_numbers = #tpu.dot_dimension_numbers<[1], [0], [0], [1], [0, 0, 1, 1], [], []>} : vector<16x32xbf16>, vector<32x32xbf16>, vector<16x32xf32> -> vector<16x32xf32>
    %39 = vector.broadcast %18 : vector<1x32xf32> to vector<16x32xf32>
    %40 = arith.addf %38, %39 : vector<16x32xf32>
    %cst_40 = arith.constant dense<0.000000e+00> : vector<16x32xf32>
    %41 = tpu.matmul %37, %8, %cst_40 {dimension_numbers = #tpu.dot_dimension_numbers<[1], [0], [0], [1], [0, 0, 1, 1], [], []>} : vector<16x32xbf16>, vector<32x32xbf16>, vector<16x32xf32> -> vector<16x32xf32>
    %42 = vector.broadcast %20 : vector<1x32xf32> to vector<16x32xf32>
    %43 = arith.addf %41, %42 : vector<16x32xf32>
    %cst_41 = arith.constant dense<0.000000e+00> : vector<16x32xf32>
    %44 = tpu.matmul %37, %10, %cst_41 {dimension_numbers = #tpu.dot_dimension_numbers<[1], [0], [0], [1], [0, 0, 1, 1], [], []>} : vector<16x32xbf16>, vector<32x32xbf16>, vector<16x32xf32> -> vector<16x32xf32>
    %45 = vector.broadcast %22 : vector<1x32xf32> to vector<16x32xf32>
    %46 = arith.addf %44, %45 : vector<16x32xf32>
    %47 = vector.shape_cast %40 : vector<16x32xf32> to vector<2x8x32xf32>
    %48 = vector.shape_cast %43 : vector<16x32xf32> to vector<2x8x32xf32>
    %49 = vector.shape_cast %46 : vector<16x32xf32> to vector<2x8x32xf32>
    %50 = tpu.concatenate %48, %48, %48, %48 in 1 : vector<2x8x32xf32>, vector<2x8x32xf32>, vector<2x8x32xf32>, vector<2x8x32xf32> -> vector<2x32x32xf32>
    %51 = vector.shape_cast %0 : vector<32x32xf32> to vector<1x32x32xf32>
    %52 = vector.broadcast %51 : vector<1x32x32xf32> to vector<2x32x32xf32>
    %53 = arith.mulf %50, %52 : vector<2x32x32xf32>
    %54 = tpu.concatenate %49, %49, %49, %49 in 1 : vector<2x8x32xf32>, vector<2x8x32xf32>, vector<2x8x32xf32>, vector<2x8x32xf32> -> vector<2x32x32xf32>
    %55 = vector.shape_cast %0 : vector<32x32xf32> to vector<1x32x32xf32>
    %56 = vector.broadcast %55 : vector<1x32x32xf32> to vector<2x32x32xf32>
    %57 = arith.mulf %54, %56 : vector<2x32x32xf32>
    "tpu.trace_start"() <{level = 10 : i32, message = "nqe,nje->nqj"}> : () -> ()
    %cst_42 = arith.constant dense<0.000000e+00> : vector<2x8x32xf32>
    %58 = tpu.matmul %47, %53, %cst_42 {dimension_numbers = #tpu.dot_dimension_numbers<[2], [2], [1], [1], [0, 0, 0, 1, 1, 1], [0], [0]>} : vector<2x8x32xf32>, vector<2x32x32xf32>, vector<2x8x32xf32> -> vector<2x8x32xf32>
    "tpu.trace_stop"() : () -> ()
    %cst_43 = arith.constant dense<0xFF800000> : vector<2x8xf32>
    %59 = vector.multi_reduction <maximumf>, %58, %cst_43 [2] : vector<2x8x32xf32> to vector<2x8xf32>
    %60 = vector.shape_cast %59 : vector<2x8xf32> to vector<2x8x1xf32>
    %61 = vector.broadcast %60 : vector<2x8x1xf32> to vector<2x8x32xf32>
    %62 = arith.subf %58, %61 : vector<2x8x32xf32>
    %63 = math.exp %62 : vector<2x8x32xf32>
    %64 = vector.shape_cast %63 : vector<2x8x32xf32> to vector<16x32xf32>
    %cst_44 = arith.constant dense<0.000000e+00> : vector<16x32xf32>
    %65 = tpu.matmul %64, %1, %cst_44 {dimension_numbers = #tpu.dot_dimension_numbers<[1], [0], [0], [1], [0, 0, 1, 1], [], []>} : vector<16x32xf32>, vector<32x32xf32>, vector<16x32xf32> -> vector<16x32xf32>
    %66 = tpu.reciprocal %65 {approx = true} : vector<16x32xf32> -> vector<16x32xf32>
    %67 = arith.mulf %64, %66 : vector<16x32xf32>
    %68 = vector.shape_cast %67 : vector<16x32xf32> to vector<2x8x32xf32>
    "tpu.trace_start"() <{level = 10 : i32, message = "nqj,nje->nqe"}> : () -> ()
    %cst_45 = arith.constant dense<0.000000e+00> : vector<2x8x32xf32>
    %69 = tpu.matmul %68, %57, %cst_45 {dimension_numbers = #tpu.dot_dimension_numbers<[2], [1], [1], [2], [0, 0, 0, 1, 1, 2], [0], [0]>} : vector<2x8x32xf32>, vector<2x32x32xf32>, vector<2x8x32xf32> -> vector<2x8x32xf32>
    "tpu.trace_stop"() : () -> ()
    %70 = vector.shape_cast %69 : vector<2x8x32xf32> to vector<16x32xf32>
    %71 = arith.truncf %70 : vector<16x32xf32> to vector<16x32xbf16>
    %cst_46 = arith.constant dense<0.000000e+00> : vector<16x32xf32>
    %72 = tpu.matmul %71, %12, %cst_46 {dimension_numbers = #tpu.dot_dimension_numbers<[1], [0], [0], [1], [0, 0, 1, 1], [], []>} : vector<16x32xbf16>, vector<32x32xbf16>, vector<16x32xf32> -> vector<16x32xf32>
    %73 = vector.broadcast %24 : vector<1x32xf32> to vector<16x32xf32>
    %74 = arith.addf %72, %73 : vector<16x32xf32>
    %75 = arith.addf %4, %74 : vector<16x32xf32>
    %cst_47 = arith.constant dense<0.000000e+00> : vector<16xf32>
    %76 = vector.multi_reduction <add>, %75, %cst_47 [1] : vector<16x32xf32> to vector<16xf32>
    %77 = vector.shape_cast %76 : vector<16xf32> to vector<16x1xf32>
    %cst_48 = arith.constant 3.200000e+01 : f32
    %78 = vector.broadcast %cst_48 : f32 to vector<16x1xf32>
    %79 = arith.divf %77, %78 : vector<16x1xf32>
    %80 = vector.broadcast %79 : vector<16x1xf32> to vector<16x32xf32>
    %81 = arith.subf %75, %80 : vector<16x32xf32>
    %82 = arith.mulf %81, %81 : vector<16x32xf32>
    %cst_49 = arith.constant dense<0.000000e+00> : vector<16xf32>
    %83 = vector.multi_reduction <add>, %82, %cst_49 [1] : vector<16x32xf32> to vector<16xf32>
    %84 = vector.shape_cast %83 : vector<16xf32> to vector<16x1xf32>
    %cst_50 = arith.constant 3.200000e+01 : f32
    %85 = vector.broadcast %cst_50 : f32 to vector<16x1xf32>
    %86 = arith.divf %84, %85 : vector<16x1xf32>
    %87 = vector.broadcast %79 : vector<16x1xf32> to vector<16x32xf32>
    %88 = arith.subf %75, %87 : vector<16x32xf32>
    %cst_51 = arith.constant 9.99999974E-6 : f32
    %89 = vector.broadcast %cst_51 : f32 to vector<16x1xf32>
    %90 = arith.addf %86, %89 : vector<16x1xf32>
    %91 = math.rsqrt %90 : vector<16x1xf32>
    %92 = vector.broadcast %91 : vector<16x1xf32> to vector<16x32xf32>
    %93 = arith.mulf %88, %92 : vector<16x32xf32>
    %94 = vector.broadcast %30 : vector<1x32xf32> to vector<16x32xf32>
    %95 = arith.mulf %93, %94 : vector<16x32xf32>
    %96 = vector.broadcast %32 : vector<1x32xf32> to vector<16x32xf32>
    %97 = arith.addf %95, %96 : vector<16x32xf32>
    %98 = arith.truncf %97 : vector<16x32xf32> to vector<16x32xbf16>
    %cst_52 = arith.constant dense<0.000000e+00> : vector<16x64xf32>
    %99 = tpu.matmul %98, %14, %cst_52 {dimension_numbers = #tpu.dot_dimension_numbers<[1], [0], [0], [1], [0, 0, 1, 1], [], []>} : vector<16x32xbf16>, vector<32x64xbf16>, vector<16x64xf32> -> vector<16x64xf32>
    %100 = vector.broadcast %26 : vector<1x64xf32> to vector<16x64xf32>
    %101 = arith.addf %99, %100 : vector<16x64xf32>
    %cst_53 = arith.constant 0.000000e+00 : f32
    %102 = vector.broadcast %cst_53 : f32 to vector<16x64xf32>
    %103 = arith.maximumf %101, %102 : vector<16x64xf32>
    %104 = arith.truncf %103 : vector<16x64xf32> to vector<16x64xbf16>
    %cst_54 = arith.constant dense<0.000000e+00> : vector<16x32xf32>
    %105 = tpu.matmul %104, %16, %cst_54 {dimension_numbers = #tpu.dot_dimension_numbers<[1], [0], [0], [1], [0, 0, 1, 1], [], []>} : vector<16x64xbf16>, vector<64x32xbf16>, vector<16x32xf32> -> vector<16x32xf32>
    %106 = vector.broadcast %28 : vector<1x32xf32> to vector<16x32xf32>
    %107 = arith.addf %105, %106 : vector<16x32xf32>
    %108 = arith.addf %97, %107 : vector<16x32xf32>
    %cst_55 = arith.constant dense<0.000000e+00> : vector<16xf32>
    %109 = vector.multi_reduction <add>, %108, %cst_55 [1] : vector<16x32xf32> to vector<16xf32>
    %110 = vector.shape_cast %109 : vector<16xf32> to vector<16x1xf32>
    %cst_56 = arith.constant 3.200000e+01 : f32
    %111 = vector.broadcast %cst_56 : f32 to vector<16x1xf32>
    %112 = arith.divf %110, %111 : vector<16x1xf32>
    %113 = vector.broadcast %112 : vector<16x1xf32> to vector<16x32xf32>
    %114 = arith.subf %108, %113 : vector<16x32xf32>
    %115 = arith.mulf %114, %114 : vector<16x32xf32>
    %cst_57 = arith.constant dense<0.000000e+00> : vector<16xf32>
    %116 = vector.multi_reduction <add>, %115, %cst_57 [1] : vector<16x32xf32> to vector<16xf32>
    %117 = vector.shape_cast %116 : vector<16xf32> to vector<16x1xf32>
    %cst_58 = arith.constant 3.200000e+01 : f32
    %118 = vector.broadcast %cst_58 : f32 to vector<16x1xf32>
    %119 = arith.divf %117, %118 : vector<16x1xf32>
    %120 = vector.broadcast %112 : vector<16x1xf32> to vector<16x32xf32>
    %121 = arith.subf %108, %120 : vector<16x32xf32>
    %cst_59 = arith.constant 9.99999974E-6 : f32
    %122 = vector.broadcast %cst_59 : f32 to vector<16x1xf32>
    %123 = arith.addf %119, %122 : vector<16x1xf32>
    %124 = math.rsqrt %123 : vector<16x1xf32>
    %125 = vector.broadcast %124 : vector<16x1xf32> to vector<16x32xf32>
    %126 = arith.mulf %121, %125 : vector<16x32xf32>
    %127 = vector.broadcast %34 : vector<1x32xf32> to vector<16x32xf32>
    %128 = arith.mulf %126, %127 : vector<16x32xf32>
    %129 = vector.broadcast %36 : vector<1x32xf32> to vector<16x32xf32>
    %130 = arith.addf %128, %129 : vector<16x32xf32>
    %c1_60 = arith.constant 1 : index
    %c0_61 = arith.constant 0 : index
    %c0_62 = arith.constant 0 : index
    %131 = vector.load %arg2[%c1_60, %c0_61, %c0_62] : memref<2x224x64xbf16, #tpu.memory_space<vmem>>, vector<1x32x32xbf16>
    %132 = vector.shape_cast %131 : vector<1x32x32xbf16> to vector<32x32xbf16>
    %c1_63 = arith.constant 1 : index
    %c32_64 = arith.constant 32 : index
    %c0_65 = arith.constant 0 : index
    %133 = vector.load %arg2[%c1_63, %c32_64, %c0_65] : memref<2x224x64xbf16, #tpu.memory_space<vmem>>, vector<1x32x32xbf16>
    %134 = vector.shape_cast %133 : vector<1x32x32xbf16> to vector<32x32xbf16>
    %c1_66 = arith.constant 1 : index
    %c64_67 = arith.constant 64 : index
    %c0_68 = arith.constant 0 : index
    %135 = vector.load %arg2[%c1_66, %c64_67, %c0_68] : memref<2x224x64xbf16, #tpu.memory_space<vmem>>, vector<1x32x32xbf16>
    %136 = vector.shape_cast %135 : vector<1x32x32xbf16> to vector<32x32xbf16>
    %c1_69 = arith.constant 1 : index
    %c96_70 = arith.constant 96 : index
    %c0_71 = arith.constant 0 : index
    %137 = vector.load %arg2[%c1_69, %c96_70, %c0_71] : memref<2x224x64xbf16, #tpu.memory_space<vmem>>, vector<1x32x32xbf16>
    %138 = vector.shape_cast %137 : vector<1x32x32xbf16> to vector<32x32xbf16>
    %c1_72 = arith.constant 1 : index
    %c128_73 = arith.constant 128 : index
    %c0_74 = arith.constant 0 : index
    %139 = vector.load %arg2[%c1_72, %c128_73, %c0_74] : memref<2x224x64xbf16, #tpu.memory_space<vmem>>, vector<1x32x64xbf16>
    %140 = vector.shape_cast %139 : vector<1x32x64xbf16> to vector<32x64xbf16>
    %c1_75 = arith.constant 1 : index
    %c160_76 = arith.constant 160 : index
    %c0_77 = arith.constant 0 : index
    %141 = vector.load %arg2[%c1_75, %c160_76, %c0_77] : memref<2x224x64xbf16, #tpu.memory_space<vmem>>, vector<1x64x32xbf16>
    %142 = vector.shape_cast %141 : vector<1x64x32xbf16> to vector<64x32xbf16>
    %c1_78 = arith.constant 1 : index
    %c0_79 = arith.constant 0 : index
    %c0_80 = arith.constant 0 : index
    %143 = vector.load %arg3[%c1_78, %c0_79, %c0_80] : memref<2x10x64xf32, #tpu.memory_space<vmem>>, vector<1x1x32xf32>
    %144 = vector.shape_cast %143 : vector<1x1x32xf32> to vector<1x32xf32>
    %c1_81 = arith.constant 1 : index
    %c1_82 = arith.constant 1 : index
    %c0_83 = arith.constant 0 : index
    %145 = vector.load %arg3[%c1_81, %c1_82, %c0_83] : memref<2x10x64xf32, #tpu.memory_space<vmem>>, vector<1x1x32xf32>
    %146 = vector.shape_cast %145 : vector<1x1x32xf32> to vector<1x32xf32>
    %c1_84 = arith.constant 1 : index
    %c2_85 = arith.constant 2 : index
    %c0_86 = arith.constant 0 : index
    %147 = vector.load %arg3[%c1_84, %c2_85, %c0_86] : memref<2x10x64xf32, #tpu.memory_space<vmem>>, vector<1x1x32xf32>
    %148 = vector.shape_cast %147 : vector<1x1x32xf32> to vector<1x32xf32>
    %c1_87 = arith.constant 1 : index
    %c3_88 = arith.constant 3 : index
    %c0_89 = arith.constant 0 : index
    %149 = vector.load %arg3[%c1_87, %c3_88, %c0_89] : memref<2x10x64xf32, #tpu.memory_space<vmem>>, vector<1x1x32xf32>
    %150 = vector.shape_cast %149 : vector<1x1x32xf32> to vector<1x32xf32>
    %c1_90 = arith.constant 1 : index
    %c4_91 = arith.constant 4 : index
    %c0_92 = arith.constant 0 : index
    %151 = vector.load %arg3[%c1_90, %c4_91, %c0_92] : memref<2x10x64xf32, #tpu.memory_space<vmem>>, vector<1x1x64xf32>
    %152 = vector.shape_cast %151 : vector<1x1x64xf32> to vector<1x64xf32>
    %c1_93 = arith.constant 1 : index
    %c5_94 = arith.constant 5 : index
    %c0_95 = arith.constant 0 : index
    %153 = vector.load %arg3[%c1_93, %c5_94, %c0_95] : memref<2x10x64xf32, #tpu.memory_space<vmem>>, vector<1x1x32xf32>
    %154 = vector.shape_cast %153 : vector<1x1x32xf32> to vector<1x32xf32>
    %c1_96 = arith.constant 1 : index
    %c6_97 = arith.constant 6 : index
    %c0_98 = arith.constant 0 : index
    %155 = vector.load %arg3[%c1_96, %c6_97, %c0_98] : memref<2x10x64xf32, #tpu.memory_space<vmem>>, vector<1x1x32xf32>
    %156 = vector.shape_cast %155 : vector<1x1x32xf32> to vector<1x32xf32>
    %c1_99 = arith.constant 1 : index
    %c7_100 = arith.constant 7 : index
    %c0_101 = arith.constant 0 : index
    %157 = vector.load %arg3[%c1_99, %c7_100, %c0_101] : memref<2x10x64xf32, #tpu.memory_space<vmem>>, vector<1x1x32xf32>
    %158 = vector.shape_cast %157 : vector<1x1x32xf32> to vector<1x32xf32>
    %c1_102 = arith.constant 1 : index
    %c8_103 = arith.constant 8 : index
    %c0_104 = arith.constant 0 : index
    %159 = vector.load %arg3[%c1_102, %c8_103, %c0_104] : memref<2x10x64xf32, #tpu.memory_space<vmem>>, vector<1x1x32xf32>
    %160 = vector.shape_cast %159 : vector<1x1x32xf32> to vector<1x32xf32>
    %c1_105 = arith.constant 1 : index
    %c9_106 = arith.constant 9 : index
    %c0_107 = arith.constant 0 : index
    %161 = vector.load %arg3[%c1_105, %c9_106, %c0_107] : memref<2x10x64xf32, #tpu.memory_space<vmem>>, vector<1x1x32xf32>
    %162 = vector.shape_cast %161 : vector<1x1x32xf32> to vector<1x32xf32>
    %163 = arith.truncf %130 : vector<16x32xf32> to vector<16x32xbf16>
    %cst_108 = arith.constant dense<0.000000e+00> : vector<16x32xf32>
    %164 = tpu.matmul %163, %132, %cst_108 {dimension_numbers = #tpu.dot_dimension_numbers<[1], [0], [0], [1], [0, 0, 1, 1], [], []>} : vector<16x32xbf16>, vector<32x32xbf16>, vector<16x32xf32> -> vector<16x32xf32>
    %165 = vector.broadcast %144 : vector<1x32xf32> to vector<16x32xf32>
    %166 = arith.addf %164, %165 : vector<16x32xf32>
    %cst_109 = arith.constant dense<0.000000e+00> : vector<16x32xf32>
    %167 = tpu.matmul %163, %134, %cst_109 {dimension_numbers = #tpu.dot_dimension_numbers<[1], [0], [0], [1], [0, 0, 1, 1], [], []>} : vector<16x32xbf16>, vector<32x32xbf16>, vector<16x32xf32> -> vector<16x32xf32>
    %168 = vector.broadcast %146 : vector<1x32xf32> to vector<16x32xf32>
    %169 = arith.addf %167, %168 : vector<16x32xf32>
    %cst_110 = arith.constant dense<0.000000e+00> : vector<16x32xf32>
    %170 = tpu.matmul %163, %136, %cst_110 {dimension_numbers = #tpu.dot_dimension_numbers<[1], [0], [0], [1], [0, 0, 1, 1], [], []>} : vector<16x32xbf16>, vector<32x32xbf16>, vector<16x32xf32> -> vector<16x32xf32>
    %171 = vector.broadcast %148 : vector<1x32xf32> to vector<16x32xf32>
    %172 = arith.addf %170, %171 : vector<16x32xf32>
    %173 = vector.shape_cast %166 : vector<16x32xf32> to vector<2x8x32xf32>
    %174 = vector.shape_cast %169 : vector<16x32xf32> to vector<2x8x32xf32>
    %175 = vector.shape_cast %172 : vector<16x32xf32> to vector<2x8x32xf32>
    %176 = tpu.concatenate %174, %174, %174, %174 in 1 : vector<2x8x32xf32>, vector<2x8x32xf32>, vector<2x8x32xf32>, vector<2x8x32xf32> -> vector<2x32x32xf32>
    %177 = vector.shape_cast %0 : vector<32x32xf32> to vector<1x32x32xf32>
    %178 = vector.broadcast %177 : vector<1x32x32xf32> to vector<2x32x32xf32>
    %179 = arith.mulf %176, %178 : vector<2x32x32xf32>
    %180 = tpu.concatenate %175, %175, %175, %175 in 1 : vector<2x8x32xf32>, vector<2x8x32xf32>, vector<2x8x32xf32>, vector<2x8x32xf32> -> vector<2x32x32xf32>
    %181 = vector.shape_cast %0 : vector<32x32xf32> to vector<1x32x32xf32>
    %182 = vector.broadcast %181 : vector<1x32x32xf32> to vector<2x32x32xf32>
    %183 = arith.mulf %180, %182 : vector<2x32x32xf32>
    "tpu.trace_start"() <{level = 10 : i32, message = "nqe,nje->nqj"}> : () -> ()
    %cst_111 = arith.constant dense<0.000000e+00> : vector<2x8x32xf32>
    %184 = tpu.matmul %173, %179, %cst_111 {dimension_numbers = #tpu.dot_dimension_numbers<[2], [2], [1], [1], [0, 0, 0, 1, 1, 1], [0], [0]>} : vector<2x8x32xf32>, vector<2x32x32xf32>, vector<2x8x32xf32> -> vector<2x8x32xf32>
    "tpu.trace_stop"() : () -> ()
    %cst_112 = arith.constant dense<0xFF800000> : vector<2x8xf32>
    %185 = vector.multi_reduction <maximumf>, %184, %cst_112 [2] : vector<2x8x32xf32> to vector<2x8xf32>
    %186 = vector.shape_cast %185 : vector<2x8xf32> to vector<2x8x1xf32>
    %187 = vector.broadcast %186 : vector<2x8x1xf32> to vector<2x8x32xf32>
    %188 = arith.subf %184, %187 : vector<2x8x32xf32>
    %189 = math.exp %188 : vector<2x8x32xf32>
    %190 = vector.shape_cast %189 : vector<2x8x32xf32> to vector<16x32xf32>
    %cst_113 = arith.constant dense<0.000000e+00> : vector<16x32xf32>
    %191 = tpu.matmul %190, %1, %cst_113 {dimension_numbers = #tpu.dot_dimension_numbers<[1], [0], [0], [1], [0, 0, 1, 1], [], []>} : vector<16x32xf32>, vector<32x32xf32>, vector<16x32xf32> -> vector<16x32xf32>
    %192 = tpu.reciprocal %191 {approx = true} : vector<16x32xf32> -> vector<16x32xf32>
    %193 = arith.mulf %190, %192 : vector<16x32xf32>
    %194 = vector.shape_cast %193 : vector<16x32xf32> to vector<2x8x32xf32>
    "tpu.trace_start"() <{level = 10 : i32, message = "nqj,nje->nqe"}> : () -> ()
    %cst_114 = arith.constant dense<0.000000e+00> : vector<2x8x32xf32>
    %195 = tpu.matmul %194, %183, %cst_114 {dimension_numbers = #tpu.dot_dimension_numbers<[2], [1], [1], [2], [0, 0, 0, 1, 1, 2], [0], [0]>} : vector<2x8x32xf32>, vector<2x32x32xf32>, vector<2x8x32xf32> -> vector<2x8x32xf32>
    "tpu.trace_stop"() : () -> ()
    %196 = vector.shape_cast %195 : vector<2x8x32xf32> to vector<16x32xf32>
    %197 = arith.truncf %196 : vector<16x32xf32> to vector<16x32xbf16>
    %cst_115 = arith.constant dense<0.000000e+00> : vector<16x32xf32>
    %198 = tpu.matmul %197, %138, %cst_115 {dimension_numbers = #tpu.dot_dimension_numbers<[1], [0], [0], [1], [0, 0, 1, 1], [], []>} : vector<16x32xbf16>, vector<32x32xbf16>, vector<16x32xf32> -> vector<16x32xf32>
    %199 = vector.broadcast %150 : vector<1x32xf32> to vector<16x32xf32>
    %200 = arith.addf %198, %199 : vector<16x32xf32>
    %201 = arith.addf %130, %200 : vector<16x32xf32>
    %cst_116 = arith.constant dense<0.000000e+00> : vector<16xf32>
    %202 = vector.multi_reduction <add>, %201, %cst_116 [1] : vector<16x32xf32> to vector<16xf32>
    %203 = vector.shape_cast %202 : vector<16xf32> to vector<16x1xf32>
    %cst_117 = arith.constant 3.200000e+01 : f32
    %204 = vector.broadcast %cst_117 : f32 to vector<16x1xf32>
    %205 = arith.divf %203, %204 : vector<16x1xf32>
    %206 = vector.broadcast %205 : vector<16x1xf32> to vector<16x32xf32>
    %207 = arith.subf %201, %206 : vector<16x32xf32>
    %208 = arith.mulf %207, %207 : vector<16x32xf32>
    %cst_118 = arith.constant dense<0.000000e+00> : vector<16xf32>
    %209 = vector.multi_reduction <add>, %208, %cst_118 [1] : vector<16x32xf32> to vector<16xf32>
    %210 = vector.shape_cast %209 : vector<16xf32> to vector<16x1xf32>
    %cst_119 = arith.constant 3.200000e+01 : f32
    %211 = vector.broadcast %cst_119 : f32 to vector<16x1xf32>
    %212 = arith.divf %210, %211 : vector<16x1xf32>
    %213 = vector.broadcast %205 : vector<16x1xf32> to vector<16x32xf32>
    %214 = arith.subf %201, %213 : vector<16x32xf32>
    %cst_120 = arith.constant 9.99999974E-6 : f32
    %215 = vector.broadcast %cst_120 : f32 to vector<16x1xf32>
    %216 = arith.addf %212, %215 : vector<16x1xf32>
    %217 = math.rsqrt %216 : vector<16x1xf32>
    %218 = vector.broadcast %217 : vector<16x1xf32> to vector<16x32xf32>
    %219 = arith.mulf %214, %218 : vector<16x32xf32>
    %220 = vector.broadcast %156 : vector<1x32xf32> to vector<16x32xf32>
    %221 = arith.mulf %219, %220 : vector<16x32xf32>
    %222 = vector.broadcast %158 : vector<1x32xf32> to vector<16x32xf32>
    %223 = arith.addf %221, %222 : vector<16x32xf32>
    %224 = arith.truncf %223 : vector<16x32xf32> to vector<16x32xbf16>
    %cst_121 = arith.constant dense<0.000000e+00> : vector<16x64xf32>
    %225 = tpu.matmul %224, %140, %cst_121 {dimension_numbers = #tpu.dot_dimension_numbers<[1], [0], [0], [1], [0, 0, 1, 1], [], []>} : vector<16x32xbf16>, vector<32x64xbf16>, vector<16x64xf32> -> vector<16x64xf32>
    %226 = vector.broadcast %152 : vector<1x64xf32> to vector<16x64xf32>
    %227 = arith.addf %225, %226 : vector<16x64xf32>
    %cst_122 = arith.constant 0.000000e+00 : f32
    %228 = vector.broadcast %cst_122 : f32 to vector<16x64xf32>
    %229 = arith.maximumf %227, %228 : vector<16x64xf32>
    %230 = arith.truncf %229 : vector<16x64xf32> to vector<16x64xbf16>
    %cst_123 = arith.constant dense<0.000000e+00> : vector<16x32xf32>
    %231 = tpu.matmul %230, %142, %cst_123 {dimension_numbers = #tpu.dot_dimension_numbers<[1], [0], [0], [1], [0, 0, 1, 1], [], []>} : vector<16x64xbf16>, vector<64x32xbf16>, vector<16x32xf32> -> vector<16x32xf32>
    %232 = vector.broadcast %154 : vector<1x32xf32> to vector<16x32xf32>
    %233 = arith.addf %231, %232 : vector<16x32xf32>
    %234 = arith.addf %223, %233 : vector<16x32xf32>
    %cst_124 = arith.constant dense<0.000000e+00> : vector<16xf32>
    %235 = vector.multi_reduction <add>, %234, %cst_124 [1] : vector<16x32xf32> to vector<16xf32>
    %236 = vector.shape_cast %235 : vector<16xf32> to vector<16x1xf32>
    %cst_125 = arith.constant 3.200000e+01 : f32
    %237 = vector.broadcast %cst_125 : f32 to vector<16x1xf32>
    %238 = arith.divf %236, %237 : vector<16x1xf32>
    %239 = vector.broadcast %238 : vector<16x1xf32> to vector<16x32xf32>
    %240 = arith.subf %234, %239 : vector<16x32xf32>
    %241 = arith.mulf %240, %240 : vector<16x32xf32>
    %cst_126 = arith.constant dense<0.000000e+00> : vector<16xf32>
    %242 = vector.multi_reduction <add>, %241, %cst_126 [1] : vector<16x32xf32> to vector<16xf32>
    %243 = vector.shape_cast %242 : vector<16xf32> to vector<16x1xf32>
    %cst_127 = arith.constant 3.200000e+01 : f32
    %244 = vector.broadcast %cst_127 : f32 to vector<16x1xf32>
    %245 = arith.divf %243, %244 : vector<16x1xf32>
    %246 = vector.broadcast %238 : vector<16x1xf32> to vector<16x32xf32>
    %247 = arith.subf %234, %246 : vector<16x32xf32>
    %cst_128 = arith.constant 9.99999974E-6 : f32
    %248 = vector.broadcast %cst_128 : f32 to vector<16x1xf32>
    %249 = arith.addf %245, %248 : vector<16x1xf32>
    %250 = math.rsqrt %249 : vector<16x1xf32>
    %251 = vector.broadcast %250 : vector<16x1xf32> to vector<16x32xf32>
    %252 = arith.mulf %247, %251 : vector<16x32xf32>
    %253 = vector.broadcast %160 : vector<1x32xf32> to vector<16x32xf32>
    %254 = arith.mulf %252, %253 : vector<16x32xf32>
    %255 = vector.broadcast %162 : vector<1x32xf32> to vector<16x32xf32>
    %256 = arith.addf %254, %255 : vector<16x32xf32>
    %c0_129 = arith.constant 0 : index
    %c0_130 = arith.constant 0 : index
    %257 = vector.load %arg4[%c0_129, %c0_130] : memref<104x32xf32, #tpu.memory_space<vmem>>, vector<1x32xf32>
    %c1_131 = arith.constant 1 : index
    %c0_132 = arith.constant 0 : index
    %258 = vector.load %arg4[%c1_131, %c0_132] : memref<104x32xf32, #tpu.memory_space<vmem>>, vector<1x32xf32>
    %cst_133 = arith.constant dense<0.000000e+00> : vector<16xf32>
    %259 = vector.multi_reduction <add>, %256, %cst_133 [1] : vector<16x32xf32> to vector<16xf32>
    %260 = vector.shape_cast %259 : vector<16xf32> to vector<16x1xf32>
    %cst_134 = arith.constant 3.200000e+01 : f32
    %261 = vector.broadcast %cst_134 : f32 to vector<16x1xf32>
    %262 = arith.divf %260, %261 : vector<16x1xf32>
    %263 = vector.broadcast %262 : vector<16x1xf32> to vector<16x32xf32>
    %264 = arith.subf %256, %263 : vector<16x32xf32>
    %265 = arith.mulf %264, %264 : vector<16x32xf32>
    %cst_135 = arith.constant dense<0.000000e+00> : vector<16xf32>
    %266 = vector.multi_reduction <add>, %265, %cst_135 [1] : vector<16x32xf32> to vector<16xf32>
    %267 = vector.shape_cast %266 : vector<16xf32> to vector<16x1xf32>
    %cst_136 = arith.constant 3.200000e+01 : f32
    %268 = vector.broadcast %cst_136 : f32 to vector<16x1xf32>
    %269 = arith.divf %267, %268 : vector<16x1xf32>
    %270 = vector.broadcast %262 : vector<16x1xf32> to vector<16x32xf32>
    %271 = arith.subf %256, %270 : vector<16x32xf32>
    %cst_137 = arith.constant 9.99999974E-6 : f32
    %272 = vector.broadcast %cst_137 : f32 to vector<16x1xf32>
    %273 = arith.addf %269, %272 : vector<16x1xf32>
    %274 = math.rsqrt %273 : vector<16x1xf32>
    %275 = vector.broadcast %274 : vector<16x1xf32> to vector<16x32xf32>
    %276 = arith.mulf %271, %275 : vector<16x32xf32>
    %277 = vector.broadcast %257 : vector<1x32xf32> to vector<16x32xf32>
    %278 = arith.mulf %276, %277 : vector<16x32xf32>
    %279 = vector.broadcast %258 : vector<1x32xf32> to vector<16x32xf32>
    %280 = arith.addf %278, %279 : vector<16x32xf32>
    %281 = vector.shape_cast %280 : vector<16x32xf32> to vector<2x8x32xf32>
    %cst_138 = arith.constant dense<0.000000e+00> : vector<2x32xf32>
    %282 = vector.multi_reduction <add>, %281, %cst_138 [1] : vector<2x8x32xf32> to vector<2x32xf32>
    %cst_139 = arith.constant 8.000000e+00 : f32
    %283 = vector.broadcast %cst_139 : f32 to vector<2x32xf32>
    %284 = arith.divf %282, %283 : vector<2x32xf32>
    %c2_140 = arith.constant 2 : index
    %c0_141 = arith.constant 0 : index
    %285 = vector.load %arg4[%c2_140, %c0_141] : memref<104x32xf32, #tpu.memory_space<vmem>>, vector<1x32xf32>
    %c3_142 = arith.constant 3 : index
    %c0_143 = arith.constant 0 : index
    %286 = vector.load %arg4[%c3_142, %c0_143] : memref<104x32xf32, #tpu.memory_space<vmem>>, vector<1x32xf32>
    %cst_144 = arith.constant dense<0.000000e+00> : vector<2xf32>
    %287 = vector.multi_reduction <add>, %284, %cst_144 [1] : vector<2x32xf32> to vector<2xf32>
    %288 = vector.shape_cast %287 : vector<2xf32> to vector<2x1xf32>
    %cst_145 = arith.constant 3.200000e+01 : f32
    %289 = vector.broadcast %cst_145 : f32 to vector<2x1xf32>
    %290 = arith.divf %288, %289 : vector<2x1xf32>
    %291 = vector.broadcast %290 : vector<2x1xf32> to vector<2x32xf32>
    %292 = arith.subf %284, %291 : vector<2x32xf32>
    %293 = arith.mulf %292, %292 : vector<2x32xf32>
    %cst_146 = arith.constant dense<0.000000e+00> : vector<2xf32>
    %294 = vector.multi_reduction <add>, %293, %cst_146 [1] : vector<2x32xf32> to vector<2xf32>
    %295 = vector.shape_cast %294 : vector<2xf32> to vector<2x1xf32>
    %cst_147 = arith.constant 3.200000e+01 : f32
    %296 = vector.broadcast %cst_147 : f32 to vector<2x1xf32>
    %297 = arith.divf %295, %296 : vector<2x1xf32>
    %298 = vector.broadcast %290 : vector<2x1xf32> to vector<2x32xf32>
    %299 = arith.subf %284, %298 : vector<2x32xf32>
    %cst_148 = arith.constant 9.99999974E-6 : f32
    %300 = vector.broadcast %cst_148 : f32 to vector<2x1xf32>
    %301 = arith.addf %297, %300 : vector<2x1xf32>
    %302 = math.rsqrt %301 : vector<2x1xf32>
    %303 = vector.broadcast %302 : vector<2x1xf32> to vector<2x32xf32>
    %304 = arith.mulf %299, %303 : vector<2x32xf32>
    %305 = vector.broadcast %285 : vector<1x32xf32> to vector<2x32xf32>
    %306 = arith.mulf %304, %305 : vector<2x32xf32>
    %307 = vector.broadcast %286 : vector<1x32xf32> to vector<2x32xf32>
    %308 = arith.addf %306, %307 : vector<2x32xf32>
    %c4_149 = arith.constant 4 : index
    %c0_150 = arith.constant 0 : index
    %309 = vector.load %arg4[%c4_149, %c0_150] : memref<104x32xf32, #tpu.memory_space<vmem>>, vector<1x8xf32>
    %c8_151 = arith.constant 8 : index
    %c0_152 = arith.constant 0 : index
    %310 = vector.load %arg4[%c8_151, %c0_152] : memref<104x32xf32, #tpu.memory_space<vmem>>, vector<32x8xf32>
    %cst_153 = arith.constant dense<0.000000e+00> : vector<2x8xf32>
    %311 = tpu.matmul %308, %310, %cst_153 {dimension_numbers = #tpu.dot_dimension_numbers<[1], [0], [0], [1], [0, 0, 1, 1], [], []>} : vector<2x32xf32>, vector<32x8xf32>, vector<2x8xf32> -> vector<2x8xf32>
    %312 = vector.broadcast %309 : vector<1x8xf32> to vector<2x8xf32>
    %313 = arith.addf %311, %312 : vector<2x8xf32>
    %314 = math.tanh %313 : vector<2x8xf32>
    %c0_154 = arith.constant 0 : index
    %c0_155 = arith.constant 0 : index
    %315 = vector.load %arg5[%c0_154, %c0_155] : memref<2x8xf32, #tpu.memory_space<vmem>>, vector<2x8xf32>
    tpu.vector_store %arg5[%c0_154, %c0_155], %314 {strides = array<i32>} : memref<2x8xf32, #tpu.memory_space<vmem>>, vector<2x8xf32>,
    return
  }
}

</mosaic_0001>

<llo_original>
// kernel: tpu_custom_call.1
$region0: #{tpu_custom_call.1}
  #allocation0 [shape = 'u32[]', space=smem, size = 0x4, offset = 0x4, fixed_abs, tag = 'smem constant byte address 0x4 - core index']
  #allocation1 [shape = 'u32[144,128]{1,0:T(1,128)}', space=vmem, size = 0x12000, scoped, tag = 'internal scratch']
  %s0 = inlined_call_operand.vmem [shape: f32[16,16], index: 0, kind: input, shape index: {}]
  %s1 = inlined_call_operand.vmem [shape: f32[16,32], index: 1, kind: input, shape index: {}]
  %s2 = inlined_call_operand.vmem [shape: bf16[2,224,64], index: 2, kind: input, shape index: {}]
  %s3 = inlined_call_operand.vmem [shape: f32[2,10,64], index: 3, kind: input, shape index: {}]
  %s4 = inlined_call_operand.vmem [shape: f32[104,32], index: 4, kind: input, shape index: {}]
  %s5 = inlined_call_operand.hbm [shape: f32[2,8], index: 5, kind: output, shape index: {}]
  %s6 = sld [smem:[#allocation0]]
  $region30: #{tpu_custom_call.1} parent=0
    _
  %s8 = ssub.s32 1, %s6
  %s9 = scalar_select 0, %s8, %s6
  $region1: #{tpu_custom_call.1} parent=0
    #allocation2 [shape = 'u8[1024]{0}', space=vmem, size = 0x400, scoped, tag = 'output window, operand 0, single buffered']
    #allocation3 [shape = 's32[1]{0}', space=sflag, size = 0x4, scoped, tag = 'scoped memory for tpu_custom_call.1']
    %10 = vsyncpa [#allocation3], 0
    // Predicated region
    $region2: #{tpu_custom_call.1} parent=1 // pred_check
      _
    $region3: #{tpu_custom_call.1} parent=1 // pred_check_branch
      %12 = sbr.rel (0) target = $region5
    $region4: #{tpu_custom_call.1} parent=1 // pred_region
      _
    $region5: #{tpu_custom_call.1} parent=1 // pred_fallthru
      _
    // Predicated region
    $region6: #{tpu_custom_call.1} parent=1 // pred_check
      _
    $region7: #{tpu_custom_call.1} parent=1 // pred_check_branch
      %14 = sbr.rel (0) target = $region9
    $region8: #{tpu_custom_call.1} parent=1 // pred_region
      _
    $region9: #{tpu_custom_call.1} parent=1 // pred_fallthru
      _
    // Predicated region
    $region10: #{tpu_custom_call.1} parent=1 // pred_check
      _
    $region11: #{tpu_custom_call.1} parent=1 // pred_check_branch
      %16 = sbr.rel (0) target = $region13
    $region12: #{tpu_custom_call.1} parent=1 // pred_region
      _
    $region13: #{tpu_custom_call.1} parent=1 // pred_fallthru
      _
    // Predicated region
    $region14: #{tpu_custom_call.1} parent=1 // pred_check
      _
    $region15: #{tpu_custom_call.1} parent=1 // pred_check_branch
      %18 = sbr.rel (0) target = $region17
    $region16: #{tpu_custom_call.1} parent=1 // pred_region
      _
    $region17: #{tpu_custom_call.1} parent=1 // pred_fallthru
      _
    // Predicated region
    $region18: #{tpu_custom_call.1} parent=1 // pred_check
      _
    $region19: #{tpu_custom_call.1} parent=1 // pred_check_branch
      %20 = sbr.rel (0) target = $region21
    $region20: #{tpu_custom_call.1} parent=1 // pred_region
      _
    $region21: #{tpu_custom_call.1} parent=1 // pred_fallthru
      _
    %v22 = vld [vmem:[%s4 + $0x28] sm:$0xff]
    %v23 = vld [vmem:[%s4 + $0x30] sm:$0xff]
    %v24 = vld [vmem:[%s4 + $0x38] sm:$0xff]
    %v25 = vld [vmem:[%s4 + $0x40] sm:$0xff]
    %v26 = vld [vmem:[%s4 + $0x48] sm:$0xff]
    %v27 = vld [vmem:[%s4 + $0x50] sm:$0xff]
    %v28 = vld [vmem:[%s4 + $0x58] sm:$0xff]
    %v29 = vld [vmem:[%s4 + $0x60] sm:$0xff]
    %v30 = vld [vmem:[%s0] sm:$0xff]
    %v31 = vld [vmem:[%s0 + $0x8] sm:$0xff]
    %v32 = vld [vmem:[%s1] sm:$0xff]
    %v33 = vld [vmem:[%s1 + $0x8] sm:$0xff]
    %vm34 = vcmask 130048
    %v36 = vsel %vm34, %v30, 0
    %v39 = vsel %vm34, %v31, 0
    %41 = vmatprep.subr.mxu0 0.0
    %42 = vmatpush1.msra.mxu0 0.0
    %43 = vmatprep.subr.mxu0 0.0
    %44 = vmatpush1.msra.mxu0 0.0
    %45 = vmatprep.subr.mxu0 0.0
    %46 = vmatpush1.msra.mxu0 0.0
    %47 = vmatprep.subr.mxu0 0.0
    %48 = vmatpush1.msra.mxu0 0.0
    %49 = vmatprep.subr.mxu0 0.0
    %50 = vmatpush1.msra.mxu0 0.0
    %51 = vmatprep.subr.mxu0 0.0
    %52 = vmatpush1.msra.mxu0 0.0
    %53 = vmatprep.subr.mxu0 0.0
    %54 = vmatpush1.msra.mxu0 0.0
    %55 = vmatprep.subr.mxu0 0.0
    %56 = vmatpush1.msra.mxu0 0.0
    %57 = vmatprep.subr.mxu0 0.0
    %58 = vmatpush1.msra.mxu0 0.0
    %59 = vmatprep.subr.mxu0 0.0
    %60 = vmatpush1.msra.mxu0 0.0
    %61 = vmatprep.subr.mxu0 0.0
    %62 = vmatpush1.msra.mxu0 0.0
    %63 = vmatprep.subr.mxu0 0.0
    %64 = vmatpush1.msra.mxu0 0.0
    %65 = vmatprep.subr.mxu0 0.0
    %66 = vmatpush1.msra.mxu0 0.0
    %67 = vmatprep.subr.mxu0 0.0
    %68 = vmatpush1.msra.mxu0 0.0
    %69 = vmatprep.subr.mxu0 0.0
    %70 = vmatpush1.msra.mxu0 %v33
    %71 = vmatprep.subr.mxu0 0.0
    %72 = vmatpush1.msra.mxu0 %v32
    %73 = vmatprep.subr.mxu0 0.0
    %74 = vmatpush2.msra.mxu0 0.0
    %75 = vmatprep.subr.mxu0 0.0
    %76 = vmatpush2.msra.mxu0 0.0
    %77 = vmatprep.subr.mxu0 0.0
    %78 = vmatpush2.msra.mxu0 0.0
    %79 = vmatprep.subr.mxu0 0.0
    %80 = vmatpush2.msra.mxu0 0.0
    %81 = vmatprep.subr.mxu0 0.0
    %82 = vmatpush2.msra.mxu0 0.0
    %83 = vmatprep.subr.mxu0 0.0
    %84 = vmatpush2.msra.mxu0 0.0
    %85 = vmatprep.subr.mxu0 0.0
    %86 = vmatpush2.msra.mxu0 0.0
    %87 = vmatprep.subr.mxu0 0.0
    %88 = vmatpush2.msra.mxu0 0.0
    %89 = vmatprep.subr.mxu0 0.0
    %90 = vmatpush2.msra.mxu0 0.0
    %91 = vmatprep.subr.mxu0 0.0
    %92 = vmatpush2.msra.mxu0 0.0
    %93 = vmatprep.subr.mxu0 0.0
    %94 = vmatpush2.msra.mxu0 0.0
    %95 = vmatprep.subr.mxu0 0.0
    %96 = vmatpush2.msra.mxu0 0.0
    %97 = vmatprep.subr.mxu0 0.0
    %98 = vmatpush2.msra.mxu0 0.0
    %99 = vmatprep.subr.mxu0 0.0
    %100 = vmatpush2.msra.mxu0 0.0
    %101 = vmatprep.subr.mxu0 0.0
    %102 = vmatpush2.msra.mxu0 0.0
    %103 = vmatprep.subr.mxu0 0.0
    %104 = vmatpush2.msra.mxu0 0.0
    %105 = vmatprep.mubr.f32.mxu0 0.0
    %106 = vmatmul.mubr.f32.gmra.mxu0 %v36
    %v107 = vpop.f32.mrf.mxu0
    %v108 = vadd.f32 0.0, %v107
    %v109 = vpop.f32.mrf.mxu0
    %110 = vmatprep.mubr.f32.mxu0 0.0
    %111 = vmatmul.mubr.f32.gmra.mxu0 %v39
    %v112 = vpop.f32.mrf.mxu0
    %v113 = vadd.f32 0.0, %v112
    %v114 = vpop.f32.mrf.mxu0
    %115 = vdwg.mxu0
    %v116 = vld [vmem:[%s2] sm:$0xf]
    %v117 = vld [vmem:[%s2 + $0x4] sm:$0xf]
    %v118 = vld [vmem:[%s2 + $0x8] sm:$0xf]
    %v119 = vld [vmem:[%s2 + $0xc] sm:$0xf]
    %v120 = vld [vmem:[%s2 + $0x10] sm:$0xf]
    %v121 = vld [vmem:[%s2 + $0x14] sm:$0xf]
    %v122 = vld [vmem:[%s2 + $0x18] sm:$0xf]
    %v123 = vld [vmem:[%s2 + $0x1c] sm:$0xf]
    %v124 = vld [vmem:[%s2 + $0x20] sm:$0xf]
    %v125 = vld [vmem:[%s2 + $0x24] sm:$0xf]
    %v126 = vld [vmem:[%s2 + $0x28] sm:$0xf]
    %v127 = vld [vmem:[%s2 + $0x2c] sm:$0xf]
    %v128 = vld [vmem:[%s2 + $0x30] sm:$0xf]
    %v129 = vld [vmem:[%s2 + $0x34] sm:$0xf]
    %v130 = vld [vmem:[%s2 + $0x38] sm:$0xf]
    %v131 = vld [vmem:[%s2 + $0x3c] sm:$0xf]
    %v132 = vld [vmem:[%s2 + $0x40] sm:$0xf]
    %v133 = vld [vmem:[%s2 + $0x44] sm:$0xf]
    %v134 = vld [vmem:[%s2 + $0x48] sm:$0xf]
    %v135 = vld [vmem:[%s2 + $0x4c] sm:$0xf]
    %v136 = vld [vmem:[%s2 + $0x50] sm:$0xf]
    %v137 = vld [vmem:[%s2 + $0x54] sm:$0xf]
    %v138 = vld [vmem:[%s2 + $0x58] sm:$0xf]
    %v139 = vld [vmem:[%s2 + $0x5c] sm:$0xf]
    %v140 = vld [vmem:[%s2 + $0x60] sm:$0xf]
    %v141 = vld [vmem:[%s2 + $0x64] sm:$0xf]
    %v142 = vld [vmem:[%s2 + $0x68] sm:$0xf]
    %v143 = vld [vmem:[%s2 + $0x6c] sm:$0xf]
    %v144 = vld [vmem:[%s3] sm:$0x1]
    %v145 = vld [vmem:[%s3 + $0x1] sm:$0x1]
    %v146 = vld [vmem:[%s3 + $0x2] sm:$0x1]
    %v147 = vld [vmem:[%s3 + $0x3] sm:$0x1]
    %v148 = vld [vmem:[%s3 + $0x4] sm:$0x1]
    %v149 = vld [vmem:[%s3 + $0x5] sm:$0x1]
    %v150 = vld [vmem:[%s3 + $0x6] sm:$0x1]
    %v151 = vld [vmem:[%s3 + $0x7] sm:$0x1]
    %v152 = vld [vmem:[%s3 + $0x8] sm:$0x1]
    %v153 = vld [vmem:[%s3 + $0x9] sm:$0x1]
    %v154 = vpack.c.bf16 %v113, %v108
    %v155 = vlaneseq
    %v156 = vshrl.u32 %v155, 7
    %v157 = vsub.s32 0, %v156
    %v158 = vrot.slane %v144, %v157
    %v163 = vunpack.c.l.b16 %v116
    %v164 = vunpack.c.l.b16 %v117
    %v165 = vunpack.c.l.b16 %v118
    %v166 = vunpack.c.l.b16 %v119
    %v167 = vpack.c.b16 %v164, %v163
    %v168 = vpack.c.b16 %v166, %v165
    %vm171 = vcmask 261120
    %v173 = vsel %vm171, %v154, 0
    %175 = vmatprep.subr.bf16.mxu0 0
    %176 = vmatpush1.bf16.msra.mxu0 0
    %177 = vmatprep.subr.bf16.mxu0 0
    %178 = vmatpush1.bf16.msra.mxu0 0
    %179 = vmatprep.subr.bf16.mxu0 0
    %180 = vmatpush1.bf16.msra.mxu0 0
    %181 = vmatprep.subr.bf16.mxu0 0
    %182 = vmatpush1.bf16.msra.mxu0 0
    %183 = vmatprep.subr.bf16.mxu0 0
    %184 = vmatpush1.bf16.msra.mxu0 0
    %185 = vmatprep.subr.bf16.mxu0 0
    %186 = vmatpush1.bf16.msra.mxu0 0
    %187 = vmatprep.subr.bf16.mxu0 0
    %188 = vmatpush1.bf16.msra.mxu0 %v168
    %189 = vmatprep.subr.bf16.mxu0 0
    %190 = vmatpush1.bf16.msra.mxu0 %v167
    %191 = vmatprep.subr.bf16.mxu0 0
    %192 = vmatpush2.bf16.msra.mxu0 0
    %193 = vmatprep.subr.bf16.mxu0 0
    %194 = vmatpush2.bf16.msra.mxu0 0
    %195 = vmatprep.subr.bf16.mxu0 0
    %196 = vmatpush2.bf16.msra.mxu0 0
    %197 = vmatprep.subr.bf16.mxu0 0
    %198 = vmatpush2.bf16.msra.mxu0 0
    %199 = vmatprep.subr.bf16.mxu0 0
    %200 = vmatpush2.bf16.msra.mxu0 0
    %201 = vmatprep.subr.bf16.mxu0 0
    %202 = vmatpush2.bf16.msra.mxu0 0
    %203 = vmatprep.subr.bf16.mxu0 0
    %204 = vmatpush2.bf16.msra.mxu0 0
    %205 = vmatprep.subr.bf16.mxu0 0
    %206 = vmatpush2.bf16.msra.mxu0 0
    %207 = vmatprep.mubr.bf16.mxu0 0
    %208 = vmatmul.mubr.bf16.gmra.mxu0 %v173
    %v209 = vpop.f32.mrf.mxu0
    %v210 = vadd.f32 %v158, %v209
    %v211 = vpop.f32.mrf.mxu0
    %v212 = vpop.f32.mrf.mxu0
    %v213 = vadd.f32 %v158, %v212
    %v214 = vpop.f32.mrf.mxu0
    %215 = vdwg.mxu0
    %v216 = vlaneseq
    %v217 = vshrl.u32 %v216, 7
    %v218 = vsub.s32 0, %v217
    %v219 = vrot.slane %v145, %v218
    %v224 = vunpack.c.l.b16 %v120
    %v225 = vunpack.c.l.b16 %v121
    %v226 = vunpack.c.l.b16 %v122
    %v227 = vunpack.c.l.b16 %v123
    %v228 = vpack.c.b16 %v225, %v224
    %v229 = vpack.c.b16 %v227, %v226
    %232 = vmatprep.subr.bf16.mxu0 0
    %233 = vmatpush1.bf16.msra.mxu0 0
    %234 = vmatprep.subr.bf16.mxu0 0
    %235 = vmatpush1.bf16.msra.mxu0 0
    %236 = vmatprep.subr.bf16.mxu0 0
    %237 = vmatpush1.bf16.msra.mxu0 0
    %238 = vmatprep.subr.bf16.mxu0 0
    %239 = vmatpush1.bf16.msra.mxu0 0
    %240 = vmatprep.subr.bf16.mxu0 0
    %241 = vmatpush1.bf16.msra.mxu0 0
    %242 = vmatprep.subr.bf16.mxu0 0
    %243 = vmatpush1.bf16.msra.mxu0 0
    %244 = vmatprep.subr.bf16.mxu0 0
    %245 = vmatpush1.bf16.msra.mxu0 %v229
    %246 = vmatprep.subr.bf16.mxu0 0
    %247 = vmatpush1.bf16.msra.mxu0 %v228
    %248 = vmatprep.subr.bf16.mxu0 0
    %249 = vmatpush2.bf16.msra.mxu0 0
    %250 = vmatprep.subr.bf16.mxu0 0
    %251 = vmatpush2.bf16.msra.mxu0 0
    %252 = vmatprep.subr.bf16.mxu0 0
    %253 = vmatpush2.bf16.msra.mxu0 0
    %254 = vmatprep.subr.bf16.mxu0 0
    %255 = vmatpush2.bf16.msra.mxu0 0
    %256 = vmatprep.subr.bf16.mxu0 0
    %257 = vmatpush2.bf16.msra.mxu0 0
    %258 = vmatprep.subr.bf16.mxu0 0
    %259 = vmatpush2.bf16.msra.mxu0 0
    %260 = vmatprep.subr.bf16.mxu0 0
    %261 = vmatpush2.bf16.msra.mxu0 0
    %262 = vmatprep.subr.bf16.mxu0 0
    %263 = vmatpush2.bf16.msra.mxu0 0
    %264 = vmatprep.mubr.bf16.mxu0 0
    %265 = vmatmul.mubr.bf16.gmra.mxu0 %v173
    %v266 = vpop.f32.mrf.mxu0
    %v267 = vadd.f32 %v219, %v266
    %v268 = vpop.f32.mrf.mxu0
    %v269 = vpop.f32.mrf.mxu0
    %v270 = vadd.f32 %v219, %v269
    %v271 = vpop.f32.mrf.mxu0
    %272 = vdwg.mxu0
    %v273 = vlaneseq
    %v274 = vshrl.u32 %v273, 7
    %v275 = vsub.s32 0, %v274
    %v276 = vrot.slane %v146, %v275
    %v281 = vunpack.c.l.b16 %v124
    %v282 = vunpack.c.l.b16 %v125
    %v283 = vunpack.c.l.b16 %v126
    %v284 = vunpack.c.l.b16 %v127
    %v285 = vpack.c.b16 %v282, %v281
    %v286 = vpack.c.b16 %v284, %v283
    %289 = vmatprep.subr.bf16.mxu0 0
    %290 = vmatpush1.bf16.msra.mxu0 0
    %291 = vmatprep.subr.bf16.mxu0 0
    %292 = vmatpush1.bf16.msra.mxu0 0
    %293 = vmatprep.subr.bf16.mxu0 0
    %294 = vmatpush1.bf16.msra.mxu0 0
    %295 = vmatprep.subr.bf16.mxu0 0
    %296 = vmatpush1.bf16.msra.mxu0 0
    %297 = vmatprep.subr.bf16.mxu0 0
    %298 = vmatpush1.bf16.msra.mxu0 0
    %299 = vmatprep.subr.bf16.mxu0 0
    %300 = vmatpush1.bf16.msra.mxu0 0
    %301 = vmatprep.subr.bf16.mxu0 0
    %302 = vmatpush1.bf16.msra.mxu0 %v286
    %303 = vmatprep.subr.bf16.mxu0 0
    %304 = vmatpush1.bf16.msra.mxu0 %v285
    %305 = vmatprep.subr.bf16.mxu0 0
    %306 = vmatpush2.bf16.msra.mxu0 0
    %307 = vmatprep.subr.bf16.mxu0 0
    %308 = vmatpush2.bf16.msra.mxu0 0
    %309 = vmatprep.subr.bf16.mxu0 0
    %310 = vmatpush2.bf16.msra.mxu0 0
    %311 = vmatprep.subr.bf16.mxu0 0
    %312 = vmatpush2.bf16.msra.mxu0 0
    %313 = vmatprep.subr.bf16.mxu0 0
    %314 = vmatpush2.bf16.msra.mxu0 0
    %315 = vmatprep.subr.bf16.mxu0 0
    %316 = vmatpush2.bf16.msra.mxu0 0
    %317 = vmatprep.subr.bf16.mxu0 0
    %318 = vmatpush2.bf16.msra.mxu0 0
    %319 = vmatprep.subr.bf16.mxu0 0
    %320 = vmatpush2.bf16.msra.mxu0 0
    %321 = vmatprep.mubr.bf16.mxu0 0
    %322 = vmatmul.mubr.bf16.gmra.mxu0 %v173
    %v323 = vpop.f32.mrf.mxu0
    %v324 = vadd.f32 %v276, %v323
    %v325 = vpop.f32.mrf.mxu0
    %v326 = vpop.f32.mrf.mxu0
    %v327 = vadd.f32 %v276, %v326
    %v328 = vpop.f32.mrf.mxu0
    %329 = vdwg.mxu0
    %v330 = vmul.f32 %v267, %v22
    %v331 = vmul.f32 %v267, %v23
    %v332 = vmul.f32 %v267, %v24
    %v333 = vmul.f32 %v267, %v25
    %v334 = vmul.f32 %v270, %v22
    %v335 = vmul.f32 %v270, %v23
    %v336 = vmul.f32 %v270, %v24
    %v337 = vmul.f32 %v270, %v25
    %v338 = vmul.f32 %v324, %v22
    %v339 = vmul.f32 %v324, %v23
    %v340 = vmul.f32 %v324, %v24
    %v341 = vmul.f32 %v324, %v25
    %v342 = vmul.f32 %v327, %v22
    %v343 = vmul.f32 %v327, %v23
    %v344 = vmul.f32 %v327, %v24
    %v345 = vmul.f32 %v327, %v25
    %v347 = vsel %vm171, %v210, 0
    %v350 = vsel %vm171, %v330, 0
    %v353 = vsel %vm171, %v331, 0
    %v356 = vsel %vm171, %v332, 0
    %v359 = vsel %vm171, %v333, 0
    %361 = vmatprep.subr.mxu0 0.0
    %362 = vmatpush1.xpose.msra.mxu0 0.0
    %363 = vmatprep.subr.mxu0 0.0
    %364 = vmatpush1.xpose.msra.mxu0 0.0
    %365 = vmatprep.subr.mxu0 0.0
    %366 = vmatpush1.xpose.msra.mxu0 0.0
    %367 = vmatprep.subr.mxu0 0.0
    %368 = vmatpush1.xpose.msra.mxu0 0.0
    %369 = vmatprep.subr.mxu0 0.0
    %370 = vmatpush1.xpose.msra.mxu0 0.0
    %371 = vmatprep.subr.mxu0 0.0
    %372 = vmatpush1.xpose.msra.mxu0 0.0
    %373 = vmatprep.subr.mxu0 0.0
    %374 = vmatpush1.xpose.msra.mxu0 0.0
    %375 = vmatprep.subr.mxu0 0.0
    %376 = vmatpush1.xpose.msra.mxu0 0.0
    %377 = vmatprep.subr.mxu0 0.0
    %378 = vmatpush1.xpose.msra.mxu0 0.0
    %379 = vmatprep.subr.mxu0 0.0
    %380 = vmatpush1.xpose.msra.mxu0 0.0
    %381 = vmatprep.subr.mxu0 0.0
    %382 = vmatpush1.xpose.msra.mxu0 0.0
    %383 = vmatprep.subr.mxu0 0.0
    %384 = vmatpush1.xpose.msra.mxu0 0.0
    %385 = vmatprep.subr.mxu0 0.0
    %386 = vmatpush1.xpose.msra.mxu0 %v359
    %387 = vmatprep.subr.mxu0 0.0
    %388 = vmatpush1.xpose.msra.mxu0 %v356
    %389 = vmatprep.subr.mxu0 0.0
    %390 = vmatpush1.xpose.msra.mxu0 %v353
    %391 = vmatprep.subr.mxu0 0.0
    %392 = vmatpush1.xpose.msra.mxu0 %v350
    %393 = vmatprep.subr.mxu0 0.0
    %394 = vmatpush2.xpose.msra.mxu0 0.0
    %395 = vmatprep.subr.mxu0 0.0
    %396 = vmatpush2.xpose.msra.mxu0 0.0
    %397 = vmatprep.subr.mxu0 0.0
    %398 = vmatpush2.xpose.msra.mxu0 0.0
    %399 = vmatprep.subr.mxu0 0.0
    %400 = vmatpush2.xpose.msra.mxu0 0.0
    %401 = vmatprep.subr.mxu0 0.0
    %402 = vmatpush2.xpose.msra.mxu0 0.0
    %403 = vmatprep.subr.mxu0 0.0
    %404 = vmatpush2.xpose.msra.mxu0 0.0
    %405 = vmatprep.subr.mxu0 0.0
    %406 = vmatpush2.xpose.msra.mxu0 0.0
    %407 = vmatprep.subr.mxu0 0.0
    %408 = vmatpush2.xpose.msra.mxu0 0.0
    %409 = vmatprep.subr.mxu0 0.0
    %410 = vmatpush2.xpose.msra.mxu0 0.0
    %411 = vmatprep.subr.mxu0 0.0
    %412 = vmatpush2.xpose.msra.mxu0 0.0
    %413 = vmatprep.subr.mxu0 0.0
    %414 = vmatpush2.xpose.msra.mxu0 0.0
    %415 = vmatprep.subr.mxu0 0.0
    %416 = vmatpush2.xpose.msra.mxu0 0.0
    %417 = vmatprep.subr.mxu0 0.0
    %418 = vmatpush2.xpose.msra.mxu0 0.0
    %419 = vmatprep.subr.mxu0 0.0
    %420 = vmatpush2.xpose.msra.mxu0 0.0
    %421 = vmatprep.subr.mxu0 0.0
    %422 = vmatpush2.xpose.msra.mxu0 0.0
    %423 = vmatprep.subr.mxu0 0.0
    %424 = vmatpush2.xpose.msra.mxu0 0.0
    %425 = vmatprep.mubr.f32.mxu0 0.0
    %426 = vmatmul.mubr.f32.gmra.mxu0 %v347
    %v427 = vpop.f32.mrf.mxu0
    %v428 = vadd.f32 0.0, %v427
    %v429 = vpop.f32.mrf.mxu0
    %430 = vdwg.mxu0
    %v432 = vsel %vm171, %v213, 0
    %v435 = vsel %vm171, %v334, 0
    %v438 = vsel %vm171, %v335, 0
    %v441 = vsel %vm171, %v336, 0
    %v444 = vsel %vm171, %v337, 0
    %446 = vmatprep.subr.mxu0 0.0
    %447 = vmatpush1.xpose.msra.mxu0 0.0
    %448 = vmatprep.subr.mxu0 0.0
    %449 = vmatpush1.xpose.msra.mxu0 0.0
    %450 = vmatprep.subr.mxu0 0.0
    %451 = vmatpush1.xpose.msra.mxu0 0.0
    %452 = vmatprep.subr.mxu0 0.0
    %453 = vmatpush1.xpose.msra.mxu0 0.0
    %454 = vmatprep.subr.mxu0 0.0
    %455 = vmatpush1.xpose.msra.mxu0 0.0
    %456 = vmatprep.subr.mxu0 0.0
    %457 = vmatpush1.xpose.msra.mxu0 0.0
    %458 = vmatprep.subr.mxu0 0.0
    %459 = vmatpush1.xpose.msra.mxu0 0.0
    %460 = vmatprep.subr.mxu0 0.0
    %461 = vmatpush1.xpose.msra.mxu0 0.0
    %462 = vmatprep.subr.mxu0 0.0
    %463 = vmatpush1.xpose.msra.mxu0 0.0
    %464 = vmatprep.subr.mxu0 0.0
    %465 = vmatpush1.xpose.msra.mxu0 0.0
    %466 = vmatprep.subr.mxu0 0.0
    %467 = vmatpush1.xpose.msra.mxu0 0.0
    %468 = vmatprep.subr.mxu0 0.0
    %469 = vmatpush1.xpose.msra.mxu0 0.0
    %470 = vmatprep.subr.mxu0 0.0
    %471 = vmatpush1.xpose.msra.mxu0 %v444
    %472 = vmatprep.subr.mxu0 0.0
    %473 = vmatpush1.xpose.msra.mxu0 %v441
    %474 = vmatprep.subr.mxu0 0.0
    %475 = vmatpush1.xpose.msra.mxu0 %v438
    %476 = vmatprep.subr.mxu0 0.0
    %477 = vmatpush1.xpose.msra.mxu0 %v435
    %478 = vmatprep.subr.mxu0 0.0
    %479 = vmatpush2.xpose.msra.mxu0 0.0
    %480 = vmatprep.subr.mxu0 0.0
    %481 = vmatpush2.xpose.msra.mxu0 0.0
    %482 = vmatprep.subr.mxu0 0.0
    %483 = vmatpush2.xpose.msra.mxu0 0.0
    %484 = vmatprep.subr.mxu0 0.0
    %485 = vmatpush2.xpose.msra.mxu0 0.0
    %486 = vmatprep.subr.mxu0 0.0
    %487 = vmatpush2.xpose.msra.mxu0 0.0
    %488 = vmatprep.subr.mxu0 0.0
    %489 = vmatpush2.xpose.msra.mxu0 0.0
    %490 = vmatprep.subr.mxu0 0.0
    %491 = vmatpush2.xpose.msra.mxu0 0.0
    %492 = vmatprep.subr.mxu0 0.0
    %493 = vmatpush2.xpose.msra.mxu0 0.0
    %494 = vmatprep.subr.mxu0 0.0
    %495 = vmatpush2.xpose.msra.mxu0 0.0
    %496 = vmatprep.subr.mxu0 0.0
    %497 = vmatpush2.xpose.msra.mxu0 0.0
    %498 = vmatprep.subr.mxu0 0.0
    %499 = vmatpush2.xpose.msra.mxu0 0.0
    %500 = vmatprep.subr.mxu0 0.0
    %501 = vmatpush2.xpose.msra.mxu0 0.0
    %502 = vmatprep.subr.mxu0 0.0
    %503 = vmatpush2.xpose.msra.mxu0 0.0
    %504 = vmatprep.subr.mxu0 0.0
    %505 = vmatpush2.xpose.msra.mxu0 0.0
    %506 = vmatprep.subr.mxu0 0.0
    %507 = vmatpush2.xpose.msra.mxu0 0.0
    %508 = vmatprep.subr.mxu0 0.0
    %509 = vmatpush2.xpose.msra.mxu0 0.0
    %510 = vmatprep.mubr.f32.mxu0 0.0
    %511 = vmatmul.mubr.f32.gmra.mxu0 %v432
    %v512 = vpop.f32.mrf.mxu0
    %v513 = vadd.f32 0.0, %v512
    %v514 = vpop.f32.mrf.mxu0
    %515 = vdwg.mxu0
    %v516 = vsel %vm171, %v428, -inf
    %517 = vmax.xlane.f32.xlu0 %v516
    %v518 = vpop.xlane.xlu0 %517
    %v519 = vsel %vm171, %v513, -inf
    %520 = vmax.xlane.f32.xlu0 %v519
    %v521 = vpop.xlane.xlu0 %520
    %v522 = vsub.f32 %v428, %v518
    %v523 = vsub.f32 %v513, %v521
    %v524 = vmul.f32 %v522, 1.442695
    %v525 = vpow.pop %v524
    %v526 = vmul.f32 %v523, 1.442695
    %v527 = vpow.pop %v526
    %v529 = vsel %vm171, %v525, 0
    %v532 = vsel %vm171, %v527, 0
    %534 = vmatprep.subr.mxu0 0.0
    %535 = vmatpush1.msra.mxu0 0.0
    %536 = vmatprep.subr.mxu0 0.0
    %537 = vmatpush1.msra.mxu0 0.0
    %538 = vmatprep.subr.mxu0 0.0
    %539 = vmatpush1.msra.mxu0 0.0
    %540 = vmatprep.subr.mxu0 0.0
    %541 = vmatpush1.msra.mxu0 0.0
    %542 = vmatprep.subr.mxu0 0.0
    %543 = vmatpush1.msra.mxu0 0.0
    %544 = vmatprep.subr.mxu0 0.0
    %545 = vmatpush1.msra.mxu0 0.0
    %546 = vmatprep.subr.mxu0 0.0
    %547 = vmatpush1.msra.mxu0 0.0
    %548 = vmatprep.subr.mxu0 0.0
    %549 = vmatpush1.msra.mxu0 0.0
    %550 = vmatprep.subr.mxu0 0.0
    %551 = vmatpush1.msra.mxu0 0.0
    %552 = vmatprep.subr.mxu0 0.0
    %553 = vmatpush1.msra.mxu0 0.0
    %554 = vmatprep.subr.mxu0 0.0
    %555 = vmatpush1.msra.mxu0 0.0
    %556 = vmatprep.subr.mxu0 0.0
    %557 = vmatpush1.msra.mxu0 0.0
    %558 = vmatprep.subr.mxu0 0.0
    %559 = vmatpush1.msra.mxu0 %v29
    %560 = vmatprep.subr.mxu0 0.0
    %561 = vmatpush1.msra.mxu0 %v28
    %562 = vmatprep.subr.mxu0 0.0
    %563 = vmatpush1.msra.mxu0 %v27
    %564 = vmatprep.subr.mxu0 0.0
    %565 = vmatpush1.msra.mxu0 %v26
    %566 = vmatprep.subr.mxu0 0.0
    %567 = vmatpush2.msra.mxu0 0.0
    %568 = vmatprep.subr.mxu0 0.0
    %569 = vmatpush2.msra.mxu0 0.0
    %570 = vmatprep.subr.mxu0 0.0
    %571 = vmatpush2.msra.mxu0 0.0
    %572 = vmatprep.subr.mxu0 0.0
    %573 = vmatpush2.msra.mxu0 0.0
    %574 = vmatprep.subr.mxu0 0.0
    %575 = vmatpush2.msra.mxu0 0.0
    %576 = vmatprep.subr.mxu0 0.0
    %577 = vmatpush2.msra.mxu0 0.0
    %578 = vmatprep.subr.mxu0 0.0
    %579 = vmatpush2.msra.mxu0 0.0
    %580 = vmatprep.subr.mxu0 0.0
    %581 = vmatpush2.msra.mxu0 0.0
    %582 = vmatprep.subr.mxu0 0.0
    %583 = vmatpush2.msra.mxu0 0.0
    %584 = vmatprep.subr.mxu0 0.0
    %585 = vmatpush2.msra.mxu0 0.0
    %586 = vmatprep.subr.mxu0 0.0
    %587 = vmatpush2.msra.mxu0 0.0
    %588 = vmatprep.subr.mxu0 0.0
    %589 = vmatpush2.msra.mxu0 0.0
    %590 = vmatprep.subr.mxu0 0.0
    %591 = vmatpush2.msra.mxu0 0.0
    %592 = vmatprep.subr.mxu0 0.0
    %593 = vmatpush2.msra.mxu0 0.0
    %594 = vmatprep.subr.mxu0 0.0
    %595 = vmatpush2.msra.mxu0 0.0
    %596 = vmatprep.subr.mxu0 0.0
    %597 = vmatpush2.msra.mxu0 0.0
    %598 = vmatprep.mubr.f32.mxu0 0.0
    %599 = vmatmul.mubr.f32.gmra.mxu0 %v529
    %v600 = vpop.f32.mrf.mxu0
    %v601 = vadd.f32 0.0, %v600
    %v602 = vpop.f32.mrf.mxu0
    %603 = vmatprep.mubr.f32.mxu0 0.0
    %604 = vmatmul.mubr.f32.gmra.mxu0 %v532
    %v605 = vpop.f32.mrf.mxu0
    %v606 = vadd.f32 0.0, %v605
    %v607 = vpop.f32.mrf.mxu0
    %608 = vdwg.mxu0
    %v609 = vrcp.pop %v601
    %v610 = vrcp.pop %v606
    %v611 = vmul.f32 %v525, %v609
    %v612 = vmul.f32 %v527, %v610
    %v614 = vsel %vm171, %v611, 0
    %616 = vmatprep.subr.mxu0 0.0
    %617 = vmatpush1.msra.mxu0 0.0
    %618 = vmatprep.subr.mxu0 0.0
    %619 = vmatpush1.msra.mxu0 0.0
    %620 = vmatprep.subr.mxu0 0.0
    %621 = vmatpush1.msra.mxu0 0.0
    %622 = vmatprep.subr.mxu0 0.0
    %623 = vmatpush1.msra.mxu0 0.0
    %624 = vmatprep.subr.mxu0 0.0
    %625 = vmatpush1.msra.mxu0 0.0
    %626 = vmatprep.subr.mxu0 0.0
    %627 = vmatpush1.msra.mxu0 0.0
    %628 = vmatprep.subr.mxu0 0.0
    %629 = vmatpush1.msra.mxu0 0.0
    %630 = vmatprep.subr.mxu0 0.0
    %631 = vmatpush1.msra.mxu0 0.0
    %632 = vmatprep.subr.mxu0 0.0
    %633 = vmatpush1.msra.mxu0 0.0
    %634 = vmatprep.subr.mxu0 0.0
    %635 = vmatpush1.msra.mxu0 0.0
    %636 = vmatprep.subr.mxu0 0.0
    %637 = vmatpush1.msra.mxu0 0.0
    %638 = vmatprep.subr.mxu0 0.0
    %639 = vmatpush1.msra.mxu0 0.0
    %640 = vmatprep.subr.mxu0 0.0
    %641 = vmatpush1.msra.mxu0 %v341
    %642 = vmatprep.subr.mxu0 0.0
    %643 = vmatpush1.msra.mxu0 %v340
    %644 = vmatprep.subr.mxu0 0.0
    %645 = vmatpush1.msra.mxu0 %v339
    %646 = vmatprep.subr.mxu0 0.0
    %647 = vmatpush1.msra.mxu0 %v338
    %648 = vmatprep.subr.mxu0 0.0
    %649 = vmatpush2.msra.mxu0 0.0
    %650 = vmatprep.subr.mxu0 0.0
    %651 = vmatpush2.msra.mxu0 0.0
    %652 = vmatprep.subr.mxu0 0.0
    %653 = vmatpush2.msra.mxu0 0.0
    %654 = vmatprep.subr.mxu0 0.0
    %655 = vmatpush2.msra.mxu0 0.0
    %656 = vmatprep.subr.mxu0 0.0
    %657 = vmatpush2.msra.mxu0 0.0
    %658 = vmatprep.subr.mxu0 0.0
    %659 = vmatpush2.msra.mxu0 0.0
    %660 = vmatprep.subr.mxu0 0.0
    %661 = vmatpush2.msra.mxu0 0.0
    %662 = vmatprep.subr.mxu0 0.0
    %663 = vmatpush2.msra.mxu0 0.0
    %664 = vmatprep.subr.mxu0 0.0
    %665 = vmatpush2.msra.mxu0 0.0
    %666 = vmatprep.subr.mxu0 0.0
    %667 = vmatpush2.msra.mxu0 0.0
    %668 = vmatprep.subr.mxu0 0.0
    %669 = vmatpush2.msra.mxu0 0.0
    %670 = vmatprep.subr.mxu0 0.0
    %671 = vmatpush2.msra.mxu0 0.0
    %672 = vmatprep.subr.mxu0 0.0
    %673 = vmatpush2.msra.mxu0 0.0
    %674 = vmatprep.subr.mxu0 0.0
    %675 = vmatpush2.msra.mxu0 0.0
    %676 = vmatprep.subr.mxu0 0.0
    %677 = vmatpush2.msra.mxu0 0.0
    %678 = vmatprep.subr.mxu0 0.0
    %679 = vmatpush2.msra.mxu0 0.0
    %680 = vmatprep.mubr.f32.mxu0 0.0
    %681 = vmatmul.mubr.f32.gmra.mxu0 %v614
    %v682 = vpop.f32.mrf.mxu0
    %v683 = vadd.f32 0.0, %v682
    %v684 = vpop.f32.mrf.mxu0
    %685 = vdwg.mxu0
    %v687 = vsel %vm171, %v612, 0
    %689 = vmatprep.subr.mxu0 0.0
    %690 = vmatpush1.msra.mxu0 0.0
    %691 = vmatprep.subr.mxu0 0.0
    %692 = vmatpush1.msra.mxu0 0.0
    %693 = vmatprep.subr.mxu0 0.0
    %694 = vmatpush1.msra.mxu0 0.0
    %695 = vmatprep.subr.mxu0 0.0
    %696 = vmatpush1.msra.mxu0 0.0
    %697 = vmatprep.subr.mxu0 0.0
    %698 = vmatpush1.msra.mxu0 0.0
    %699 = vmatprep.subr.mxu0 0.0
    %700 = vmatpush1.msra.mxu0 0.0
    %701 = vmatprep.subr.mxu0 0.0
    %702 = vmatpush1.msra.mxu0 0.0
    %703 = vmatprep.subr.mxu0 0.0
    %704 = vmatpush1.msra.mxu0 0.0
    %705 = vmatprep.subr.mxu0 0.0
    %706 = vmatpush1.msra.mxu0 0.0
    %707 = vmatprep.subr.mxu0 0.0
    %708 = vmatpush1.msra.mxu0 0.0
    %709 = vmatprep.subr.mxu0 0.0
    %710 = vmatpush1.msra.mxu0 0.0
    %711 = vmatprep.subr.mxu0 0.0
    %712 = vmatpush1.msra.mxu0 0.0
    %713 = vmatprep.subr.mxu0 0.0
    %714 = vmatpush1.msra.mxu0 %v345
    %715 = vmatprep.subr.mxu0 0.0
    %716 = vmatpush1.msra.mxu0 %v344
    %717 = vmatprep.subr.mxu0 0.0
    %718 = vmatpush1.msra.mxu0 %v343
    %719 = vmatprep.subr.mxu0 0.0
    %720 = vmatpush1.msra.mxu0 %v342
    %721 = vmatprep.subr.mxu0 0.0
    %722 = vmatpush2.msra.mxu0 0.0
    %723 = vmatprep.subr.mxu0 0.0
    %724 = vmatpush2.msra.mxu0 0.0
    %725 = vmatprep.subr.mxu0 0.0
    %726 = vmatpush2.msra.mxu0 0.0
    %727 = vmatprep.subr.mxu0 0.0
    %728 = vmatpush2.msra.mxu0 0.0
    %729 = vmatprep.subr.mxu0 0.0
    %730 = vmatpush2.msra.mxu0 0.0
    %731 = vmatprep.subr.mxu0 0.0
    %732 = vmatpush2.msra.mxu0 0.0
    %733 = vmatprep.subr.mxu0 0.0
    %734 = vmatpush2.msra.mxu0 0.0
    %735 = vmatprep.subr.mxu0 0.0
    %736 = vmatpush2.msra.mxu0 0.0
    %737 = vmatprep.subr.mxu0 0.0
    %738 = vmatpush2.msra.mxu0 0.0
    %739 = vmatprep.subr.mxu0 0.0
    %740 = vmatpush2.msra.mxu0 0.0
    %741 = vmatprep.subr.mxu0 0.0
    %742 = vmatpush2.msra.mxu0 0.0
    %743 = vmatprep.subr.mxu0 0.0
    %744 = vmatpush2.msra.mxu0 0.0
    %745 = vmatprep.subr.mxu0 0.0
    %746 = vmatpush2.msra.mxu0 0.0
    %747 = vmatprep.subr.mxu0 0.0
    %748 = vmatpush2.msra.mxu0 0.0
    %749 = vmatprep.subr.mxu0 0.0
    %750 = vmatpush2.msra.mxu0 0.0
    %751 = vmatprep.subr.mxu0 0.0
    %752 = vmatpush2.msra.mxu0 0.0
    %753 = vmatprep.mubr.f32.mxu0 0.0
    %754 = vmatmul.mubr.f32.gmra.mxu0 %v687
    %v755 = vpop.f32.mrf.mxu0
    %v756 = vadd.f32 0.0, %v755
    %v757 = vpop.f32.mrf.mxu0
    %758 = vdwg.mxu0
    %v759 = vpack.c.bf16 %v756, %v683
    %v760 = vlaneseq
    %v761 = vshrl.u32 %v760, 7
    %v762 = vsub.s32 0, %v761
    %v763 = vrot.slane %v147, %v762
    %v768 = vunpack.c.l.b16 %v128
    %v769 = vunpack.c.l.b16 %v129
    %v770 = vunpack.c.l.b16 %v130
    %v771 = vunpack.c.l.b16 %v131
    %v772 = vpack.c.b16 %v769, %v768
    %v773 = vpack.c.b16 %v771, %v770
    %v777 = vsel %vm171, %v759, 0
    %779 = vmatprep.subr.bf16.mxu0 0
    %780 = vmatpush1.bf16.msra.mxu0 0
    %781 = vmatprep.subr.bf16.mxu0 0
    %782 = vmatpush1.bf16.msra.mxu0 0
    %783 = vmatprep.subr.bf16.mxu0 0
    %784 = vmatpush1.bf16.msra.mxu0 0
    %785 = vmatprep.subr.bf16.mxu0 0
    %786 = vmatpush1.bf16.msra.mxu0 0
    %787 = vmatprep.subr.bf16.mxu0 0
    %788 = vmatpush1.bf16.msra.mxu0 0
    %789 = vmatprep.subr.bf16.mxu0 0
    %790 = vmatpush1.bf16.msra.mxu0 0
    %791 = vmatprep.subr.bf16.mxu0 0
    %792 = vmatpush1.bf16.msra.mxu0 %v773
    %793 = vmatprep.subr.bf16.mxu0 0
    %794 = vmatpush1.bf16.msra.mxu0 %v772
    %795 = vmatprep.subr.bf16.mxu0 0
    %796 = vmatpush2.bf16.msra.mxu0 0
    %797 = vmatprep.subr.bf16.mxu0 0
    %798 = vmatpush2.bf16.msra.mxu0 0
    %799 = vmatprep.subr.bf16.mxu0 0
    %800 = vmatpush2.bf16.msra.mxu0 0
    %801 = vmatprep.subr.bf16.mxu0 0
    %802 = vmatpush2.bf16.msra.mxu0 0
    %803 = vmatprep.subr.bf16.mxu0 0
    %804 = vmatpush2.bf16.msra.mxu0 0
    %805 = vmatprep.subr.bf16.mxu0 0
    %806 = vmatpush2.bf16.msra.mxu0 0
    %807 = vmatprep.subr.bf16.mxu0 0
    %808 = vmatpush2.bf16.msra.mxu0 0
    %809 = vmatprep.subr.bf16.mxu0 0
    %810 = vmatpush2.bf16.msra.mxu0 0
    %811 = vmatprep.mubr.bf16.mxu0 0
    %812 = vmatmul.mubr.bf16.gmra.mxu0 %v777
    %v813 = vpop.f32.mrf.mxu0
    %v814 = vadd.f32 %v763, %v813
    %v815 = vpop.f32.mrf.mxu0
    %v816 = vpop.f32.mrf.mxu0
    %v817 = vadd.f32 %v763, %v816
    %v818 = vpop.f32.mrf.mxu0
    %819 = vdwg.mxu0
    %v820 = vadd.f32 %v108, %v814
    %v821 = vadd.f32 %v113, %v817
    %v822 = vsel %vm171, %v820, 0.0
    %823 = vadd.xlane.f32.xlu0 %v822
    %v824 = vpop.xlane.xlu0 %823
    %v825 = vsel %vm171, %v821, 0.0
    %826 = vadd.xlane.f32.xlu0 %v825
    %v827 = vpop.xlane.xlu0 %826
    %v828 = vrcp.pop 32.0
    %v829 = vmul.f32 %v824, %v828
    %v830 = vmul.f32 %v827, %v828
    %v831 = vsub.f32 %v820, %v829
    %v832 = vsub.f32 %v821, %v830
    %v833 = vmul.f32 %v831, %v831
    %v834 = vmul.f32 %v832, %v832
    %v835 = vsel %vm171, %v833, 0.0
    %836 = vadd.xlane.f32.xlu0 %v835
    %v837 = vpop.xlane.xlu0 %836
    %v838 = vsel %vm171, %v834, 0.0
    %839 = vadd.xlane.f32.xlu0 %v838
    %v840 = vpop.xlane.xlu0 %839
    %v841 = vmul.f32 %v837, %v828
    %v842 = vmul.f32 %v840, %v828
    %v843 = vadd.f32 %v841, 1e-05
    %v844 = vadd.f32 %v842, 1e-05
    %v845 = vrsqrt.pop %v843
    %v846 = vrsqrt.pop %v844
    %v847 = vmul.f32 %v831, %v845
    %v848 = vmul.f32 %v832, %v846
    %v849 = vlaneseq
    %v850 = vshrl.u32 %v849, 7
    %v851 = vsub.s32 0, %v850
    %v852 = vrot.slane %v150, %v851
    %v853 = vmul.f32 %v847, %v852
    %v854 = vmul.f32 %v848, %v852
    %v855 = vlaneseq
    %v856 = vshrl.u32 %v855, 7
    %v857 = vsub.s32 0, %v856
    %v858 = vrot.slane %v151, %v857
    %v859 = vadd.f32 %v853, %v858
    %v860 = vadd.f32 %v854, %v858
    %v861 = vpack.c.bf16 %v860, %v859
    %v862 = vlaneseq
    %v863 = vshrl.u32 %v862, 7
    %v864 = vsub.s32 0, %v863
    %v865 = vrot.slane %v148, %v864
    %v870 = vunpack.c.l.b16 %v132
    %v871 = vunpack.c.l.b16 %v133
    %v872 = vunpack.c.l.b16 %v134
    %v873 = vunpack.c.l.b16 %v135
    %v874 = vpack.c.b16 %v871, %v870
    %v875 = vpack.c.b16 %v873, %v872
    %v879 = vsel %vm171, %v861, 0
    %881 = vmatprep.subr.bf16.mxu0 0
    %882 = vmatpush1.bf16.msra.mxu0 0
    %883 = vmatprep.subr.bf16.mxu0 0
    %884 = vmatpush1.bf16.msra.mxu0 0
    %885 = vmatprep.subr.bf16.mxu0 0
    %886 = vmatpush1.bf16.msra.mxu0 0
    %887 = vmatprep.subr.bf16.mxu0 0
    %888 = vmatpush1.bf16.msra.mxu0 0
    %889 = vmatprep.subr.bf16.mxu0 0
    %890 = vmatpush1.bf16.msra.mxu0 0
    %891 = vmatprep.subr.bf16.mxu0 0
    %892 = vmatpush1.bf16.msra.mxu0 0
    %893 = vmatprep.subr.bf16.mxu0 0
    %894 = vmatpush1.bf16.msra.mxu0 %v875
    %895 = vmatprep.subr.bf16.mxu0 0
    %896 = vmatpush1.bf16.msra.mxu0 %v874
    %897 = vmatprep.subr.bf16.mxu0 0
    %898 = vmatpush2.bf16.msra.mxu0 0
    %899 = vmatprep.subr.bf16.mxu0 0
    %900 = vmatpush2.bf16.msra.mxu0 0
    %901 = vmatprep.subr.bf16.mxu0 0
    %902 = vmatpush2.bf16.msra.mxu0 0
    %903 = vmatprep.subr.bf16.mxu0 0
    %904 = vmatpush2.bf16.msra.mxu0 0
    %905 = vmatprep.subr.bf16.mxu0 0
    %906 = vmatpush2.bf16.msra.mxu0 0
    %907 = vmatprep.subr.bf16.mxu0 0
    %908 = vmatpush2.bf16.msra.mxu0 0
    %909 = vmatprep.subr.bf16.mxu0 0
    %910 = vmatpush2.bf16.msra.mxu0 0
    %911 = vmatprep.subr.bf16.mxu0 0
    %912 = vmatpush2.bf16.msra.mxu0 0
    %913 = vmatprep.mubr.bf16.mxu0 0
    %914 = vmatmul.mubr.bf16.gmra.mxu0 %v879
    %v915 = vpop.f32.mrf.mxu0
    %v916 = vadd.f32 %v865, %v915
    %v917 = vpop.f32.mrf.mxu0
    %v918 = vpop.f32.mrf.mxu0
    %v919 = vadd.f32 %v865, %v918
    %v920 = vpop.f32.mrf.mxu0
    %921 = vdwg.mxu0
    %v922 = vmax.f32 %v916, 0.0
    %v923 = vmax.f32 %v919, 0.0
    %v924 = vpack.c.bf16 %v923, %v922
    %v925 = vlaneseq
    %v926 = vshrl.u32 %v925, 7
    %v927 = vsub.s32 0, %v926
    %v928 = vrot.slane %v149, %v927
    %v937 = vunpack.c.l.b16 %v136
    %v938 = vunpack.c.l.b16 %v137
    %v939 = vunpack.c.l.b16 %v138
    %v940 = vunpack.c.l.b16 %v139
    %v941 = vunpack.c.l.b16 %v140
    %v942 = vunpack.c.l.b16 %v141
    %v943 = vunpack.c.l.b16 %v142
    %v944 = vunpack.c.l.b16 %v143
    %v945 = vpack.c.b16 %v938, %v937
    %v946 = vpack.c.b16 %v940, %v939
    %v947 = vpack.c.b16 %v942, %v941
    %v948 = vpack.c.b16 %v944, %v943
    %vm953 = vcmask 523264
    %v955 = vsel %vm953, %v924, 0
    %957 = vmatprep.subr.bf16.mxu0 0
    %958 = vmatpush1.bf16.msra.mxu0 0
    %959 = vmatprep.subr.bf16.mxu0 0
    %960 = vmatpush1.bf16.msra.mxu0 0
    %961 = vmatprep.subr.bf16.mxu0 0
    %962 = vmatpush1.bf16.msra.mxu0 0
    %963 = vmatprep.subr.bf16.mxu0 0
    %964 = vmatpush1.bf16.msra.mxu0 0
    %965 = vmatprep.subr.bf16.mxu0 0
    %966 = vmatpush1.bf16.msra.mxu0 %v948
    %967 = vmatprep.subr.bf16.mxu0 0
    %968 = vmatpush1.bf16.msra.mxu0 %v947
    %969 = vmatprep.subr.bf16.mxu0 0
    %970 = vmatpush1.bf16.msra.mxu0 %v946
    %971 = vmatprep.subr.bf16.mxu0 0
    %972 = vmatpush1.bf16.msra.mxu0 %v945
    %973 = vmatprep.subr.bf16.mxu0 0
    %974 = vmatpush2.bf16.msra.mxu0 0
    %975 = vmatprep.subr.bf16.mxu0 0
    %976 = vmatpush2.bf16.msra.mxu0 0
    %977 = vmatprep.subr.bf16.mxu0 0
    %978 = vmatpush2.bf16.msra.mxu0 0
    %979 = vmatprep.subr.bf16.mxu0 0
    %980 = vmatpush2.bf16.msra.mxu0 0
    %981 = vmatprep.subr.bf16.mxu0 0
    %982 = vmatpush2.bf16.msra.mxu0 0
    %983 = vmatprep.subr.bf16.mxu0 0
    %984 = vmatpush2.bf16.msra.mxu0 0
    %985 = vmatprep.subr.bf16.mxu0 0
    %986 = vmatpush2.bf16.msra.mxu0 0
    %987 = vmatprep.subr.bf16.mxu0 0
    %988 = vmatpush2.bf16.msra.mxu0 0
    %989 = vmatprep.mubr.bf16.mxu0 0
    %990 = vmatmul.mubr.bf16.gmra.mxu0 %v955
    %v991 = vpop.f32.mrf.mxu0
    %v992 = vadd.f32 %v928, %v991
    %v993 = vpop.f32.mrf.mxu0
    %v994 = vpop.f32.mrf.mxu0
    %v995 = vadd.f32 %v928, %v994
    %v996 = vpop.f32.mrf.mxu0
    %997 = vdwg.mxu0
    %v998 = vadd.f32 %v859, %v992
    %v999 = vadd.f32 %v860, %v995
    %v1000 = vsel %vm171, %v998, 0.0
    %1001 = vadd.xlane.f32.xlu0 %v1000
    %v1002 = vpop.xlane.xlu0 %1001
    %v1003 = vsel %vm171, %v999, 0.0
    %1004 = vadd.xlane.f32.xlu0 %v1003
    %v1005 = vpop.xlane.xlu0 %1004
    %v1006 = vmul.f32 %v1002, %v828
    %v1007 = vmul.f32 %v1005, %v828
    %v1008 = vsub.f32 %v998, %v1006
    %v1009 = vsub.f32 %v999, %v1007
    %v1010 = vmul.f32 %v1008, %v1008
    %v1011 = vmul.f32 %v1009, %v1009
    %v1012 = vsel %vm171, %v1010, 0.0
    %1013 = vadd.xlane.f32.xlu0 %v1012
    %v1014 = vpop.xlane.xlu0 %1013
    %v1015 = vsel %vm171, %v1011, 0.0
    %1016 = vadd.xlane.f32.xlu0 %v1015
    %v1017 = vpop.xlane.xlu0 %1016
    %v1018 = vmul.f32 %v1014, %v828
    %v1019 = vmul.f32 %v1017, %v828
    %v1020 = vadd.f32 %v1018, 1e-05
    %v1021 = vadd.f32 %v1019, 1e-05
    %v1022 = vrsqrt.pop %v1020
    %v1023 = vrsqrt.pop %v1021
    %v1024 = vmul.f32 %v1008, %v1022
    %v1025 = vmul.f32 %v1009, %v1023
    %v1026 = vlaneseq
    %v1027 = vshrl.u32 %v1026, 7
    %v1028 = vsub.s32 0, %v1027
    %v1029 = vrot.slane %v152, %v1028
    %v1030 = vmul.f32 %v1024, %v1029
    %v1031 = vmul.f32 %v1025, %v1029
    %v1032 = vlaneseq
    %v1033 = vshrl.u32 %v1032, 7
    %v1034 = vsub.s32 0, %v1033
    %v1035 = vrot.slane %v153, %v1034
    %v1036 = vadd.f32 %v1030, %v1035
    %v1037 = vadd.f32 %v1031, %v1035
    %s1038 = scalar_lea.vmem %s2, 112
    %v1039 = vld [vmem:[%s1038] sm:$0xf]
    %v1040 = vld [vmem:[%s1038 + $0x4] sm:$0xf]
    %v1041 = vld [vmem:[%s1038 + $0x8] sm:$0xf]
    %v1042 = vld [vmem:[%s1038 + $0xc] sm:$0xf]
    %v1043 = vld [vmem:[%s1038 + $0x10] sm:$0xf]
    %v1044 = vld [vmem:[%s1038 + $0x14] sm:$0xf]
    %v1045 = vld [vmem:[%s1038 + $0x18] sm:$0xf]
    %v1046 = vld [vmem:[%s1038 + $0x1c] sm:$0xf]
    %v1047 = vld [vmem:[%s1038 + $0x20] sm:$0xf]
    %v1048 = vld [vmem:[%s1038 + $0x24] sm:$0xf]
    %v1049 = vld [vmem:[%s1038 + $0x28] sm:$0xf]
    %v1050 = vld [vmem:[%s1038 + $0x2c] sm:$0xf]
    %v1051 = vld [vmem:[%s1038 + $0x30] sm:$0xf]
    %v1052 = vld [vmem:[%s1038 + $0x34] sm:$0xf]
    %v1053 = vld [vmem:[%s1038 + $0x38] sm:$0xf]
    %v1054 = vld [vmem:[%s1038 + $0x3c] sm:$0xf]
    %v1055 = vld [vmem:[%s1038 + $0x40] sm:$0xf]
    %v1056 = vld [vmem:[%s1038 + $0x44] sm:$0xf]
    %v1057 = vld [vmem:[%s1038 + $0x48] sm:$0xf]
    %v1058 = vld [vmem:[%s1038 + $0x4c] sm:$0xf]
    %v1059 = vld [vmem:[%s1038 + $0x50] sm:$0xf]
    %v1060 = vld [vmem:[%s1038 + $0x54] sm:$0xf]
    %v1061 = vld [vmem:[%s1038 + $0x58] sm:$0xf]
    %v1062 = vld [vmem:[%s1038 + $0x5c] sm:$0xf]
    %v1063 = vld [vmem:[%s1038 + $0x60] sm:$0xf]
    %v1064 = vld [vmem:[%s1038 + $0x64] sm:$0xf]
    %v1065 = vld [vmem:[%s1038 + $0x68] sm:$0xf]
    %v1066 = vld [vmem:[%s1038 + $0x6c] sm:$0xf]
    %s1067 = scalar_lea.vmem %s3, 16
    %v1068 = vld [vmem:[%s1067] sm:$0x1]
    %v1069 = vld [vmem:[%s1067 + $0x1] sm:$0x1]
    %v1070 = vld [vmem:[%s1067 + $0x2] sm:$0x1]
    %v1071 = vld [vmem:[%s1067 + $0x3] sm:$0x1]
    %v1072 = vld [vmem:[%s1067 + $0x4] sm:$0x1]
    %v1073 = vld [vmem:[%s1067 + $0x5] sm:$0x1]
    %v1074 = vld [vmem:[%s1067 + $0x6] sm:$0x1]
    %v1075 = vld [vmem:[%s1067 + $0x7] sm:$0x1]
    %v1076 = vld [vmem:[%s1067 + $0x8] sm:$0x1]
    %v1077 = vld [vmem:[%s1067 + $0x9] sm:$0x1]
    %v1078 = vpack.c.bf16 %v1037, %v1036
    %v1079 = vlaneseq
    %v1080 = vshrl.u32 %v1079, 7
    %v1081 = vsub.s32 0, %v1080
    %v1082 = vrot.slane %v1068, %v1081
    %v1087 = vunpack.c.l.b16 %v1039
    %v1088 = vunpack.c.l.b16 %v1040
    %v1089 = vunpack.c.l.b16 %v1041
    %v1090 = vunpack.c.l.b16 %v1042
    %v1091 = vpack.c.b16 %v1088, %v1087
    %v1092 = vpack.c.b16 %v1090, %v1089
    %v1096 = vsel %vm171, %v1078, 0
    %1098 = vmatprep.subr.bf16.mxu0 0
    %1099 = vmatpush1.bf16.msra.mxu0 0
    %1100 = vmatprep.subr.bf16.mxu0 0
    %1101 = vmatpush1.bf16.msra.mxu0 0
    %1102 = vmatprep.subr.bf16.mxu0 0
    %1103 = vmatpush1.bf16.msra.mxu0 0
    %1104 = vmatprep.subr.bf16.mxu0 0
    %1105 = vmatpush1.bf16.msra.mxu0 0
    %1106 = vmatprep.subr.bf16.mxu0 0
    %1107 = vmatpush1.bf16.msra.mxu0 0
    %1108 = vmatprep.subr.bf16.mxu0 0
    %1109 = vmatpush1.bf16.msra.mxu0 0
    %1110 = vmatprep.subr.bf16.mxu0 0
    %1111 = vmatpush1.bf16.msra.mxu0 %v1092
    %1112 = vmatprep.subr.bf16.mxu0 0
    %1113 = vmatpush1.bf16.msra.mxu0 %v1091
    %1114 = vmatprep.subr.bf16.mxu0 0
    %1115 = vmatpush2.bf16.msra.mxu0 0
    %1116 = vmatprep.subr.bf16.mxu0 0
    %1117 = vmatpush2.bf16.msra.mxu0 0
    %1118 = vmatprep.subr.bf16.mxu0 0
    %1119 = vmatpush2.bf16.msra.mxu0 0
    %1120 = vmatprep.subr.bf16.mxu0 0
    %1121 = vmatpush2.bf16.msra.mxu0 0
    %1122 = vmatprep.subr.bf16.mxu0 0
    %1123 = vmatpush2.bf16.msra.mxu0 0
    %1124 = vmatprep.subr.bf16.mxu0 0
    %1125 = vmatpush2.bf16.msra.mxu0 0
    %1126 = vmatprep.subr.bf16.mxu0 0
    %1127 = vmatpush2.bf16.msra.mxu0 0
    %1128 = vmatprep.subr.bf16.mxu0 0
    %1129 = vmatpush2.bf16.msra.mxu0 0
    %1130 = vmatprep.mubr.bf16.mxu0 0
    %1131 = vmatmul.mubr.bf16.gmra.mxu0 %v1096
    %v1132 = vpop.f32.mrf.mxu0
    %v1133 = vadd.f32 %v1082, %v1132
    %v1134 = vpop.f32.mrf.mxu0
    %v1135 = vpop.f32.mrf.mxu0
    %v1136 = vadd.f32 %v1082, %v1135
    %v1137 = vpop.f32.mrf.mxu0
    %1138 = vdwg.mxu0
    %v1139 = vlaneseq
    %v1140 = vshrl.u32 %v1139, 7
    %v1141 = vsub.s32 0, %v1140
    %v1142 = vrot.slane %v1069, %v1141
    %v1147 = vunpack.c.l.b16 %v1043
    %v1148 = vunpack.c.l.b16 %v1044
    %v1149 = vunpack.c.l.b16 %v1045
    %v1150 = vunpack.c.l.b16 %v1046
    %v1151 = vpack.c.b16 %v1148, %v1147
    %v1152 = vpack.c.b16 %v1150, %v1149
    %1155 = vmatprep.subr.bf16.mxu0 0
    %1156 = vmatpush1.bf16.msra.mxu0 0
    %1157 = vmatprep.subr.bf16.mxu0 0
    %1158 = vmatpush1.bf16.msra.mxu0 0
    %1159 = vmatprep.subr.bf16.mxu0 0
    %1160 = vmatpush1.bf16.msra.mxu0 0
    %1161 = vmatprep.subr.bf16.mxu0 0
    %1162 = vmatpush1.bf16.msra.mxu0 0
    %1163 = vmatprep.subr.bf16.mxu0 0
    %1164 = vmatpush1.bf16.msra.mxu0 0
    %1165 = vmatprep.subr.bf16.mxu0 0
    %1166 = vmatpush1.bf16.msra.mxu0 0
    %1167 = vmatprep.subr.bf16.mxu0 0
    %1168 = vmatpush1.bf16.msra.mxu0 %v1152
    %1169 = vmatprep.subr.bf16.mxu0 0
    %1170 = vmatpush1.bf16.msra.mxu0 %v1151
    %1171 = vmatprep.subr.bf16.mxu0 0
    %1172 = vmatpush2.bf16.msra.mxu0 0
    %1173 = vmatprep.subr.bf16.mxu0 0
    %1174 = vmatpush2.bf16.msra.mxu0 0
    %1175 = vmatprep.subr.bf16.mxu0 0
    %1176 = vmatpush2.bf16.msra.mxu0 0
    %1177 = vmatprep.subr.bf16.mxu0 0
    %1178 = vmatpush2.bf16.msra.mxu0 0
    %1179 = vmatprep.subr.bf16.mxu0 0
    %1180 = vmatpush2.bf16.msra.mxu0 0
    %1181 = vmatprep.subr.bf16.mxu0 0
    %1182 = vmatpush2.bf16.msra.mxu0 0
    %1183 = vmatprep.subr.bf16.mxu0 0
    %1184 = vmatpush2.bf16.msra.mxu0 0
    %1185 = vmatprep.subr.bf16.mxu0 0
    %1186 = vmatpush2.bf16.msra.mxu0 0
    %1187 = vmatprep.mubr.bf16.mxu0 0
    %1188 = vmatmul.mubr.bf16.gmra.mxu0 %v1096
    %v1189 = vpop.f32.mrf.mxu0
    %v1190 = vadd.f32 %v1142, %v1189
    %v1191 = vpop.f32.mrf.mxu0
    %v1192 = vpop.f32.mrf.mxu0
    %v1193 = vadd.f32 %v1142, %v1192
    %v1194 = vpop.f32.mrf.mxu0
    %1195 = vdwg.mxu0
    %v1196 = vlaneseq
    %v1197 = vshrl.u32 %v1196, 7
    %v1198 = vsub.s32 0, %v1197
    %v1199 = vrot.slane %v1070, %v1198
    %v1204 = vunpack.c.l.b16 %v1047
    %v1205 = vunpack.c.l.b16 %v1048
    %v1206 = vunpack.c.l.b16 %v1049
    %v1207 = vunpack.c.l.b16 %v1050
    %v1208 = vpack.c.b16 %v1205, %v1204
    %v1209 = vpack.c.b16 %v1207, %v1206
    %1212 = vmatprep.subr.bf16.mxu0 0
    %1213 = vmatpush1.bf16.msra.mxu0 0
    %1214 = vmatprep.subr.bf16.mxu0 0
    %1215 = vmatpush1.bf16.msra.mxu0 0
    %1216 = vmatprep.subr.bf16.mxu0 0
    %1217 = vmatpush1.bf16.msra.mxu0 0
    %1218 = vmatprep.subr.bf16.mxu0 0
    %1219 = vmatpush1.bf16.msra.mxu0 0
    %1220 = vmatprep.subr.bf16.mxu0 0
    %1221 = vmatpush1.bf16.msra.mxu0 0
    %1222 = vmatprep.subr.bf16.mxu0 0
    %1223 = vmatpush1.bf16.msra.mxu0 0
    %1224 = vmatprep.subr.bf16.mxu0 0
    %1225 = vmatpush1.bf16.msra.mxu0 %v1209
    %1226 = vmatprep.subr.bf16.mxu0 0
    %1227 = vmatpush1.bf16.msra.mxu0 %v1208
    %1228 = vmatprep.subr.bf16.mxu0 0
    %1229 = vmatpush2.bf16.msra.mxu0 0
    %1230 = vmatprep.subr.bf16.mxu0 0
    %1231 = vmatpush2.bf16.msra.mxu0 0
    %1232 = vmatprep.subr.bf16.mxu0 0
    %1233 = vmatpush2.bf16.msra.mxu0 0
    %1234 = vmatprep.subr.bf16.mxu0 0
    %1235 = vmatpush2.bf16.msra.mxu0 0
    %1236 = vmatprep.subr.bf16.mxu0 0
    %1237 = vmatpush2.bf16.msra.mxu0 0
    %1238 = vmatprep.subr.bf16.mxu0 0
    %1239 = vmatpush2.bf16.msra.mxu0 0
    %1240 = vmatprep.subr.bf16.mxu0 0
    %1241 = vmatpush2.bf16.msra.mxu0 0
    %1242 = vmatprep.subr.bf16.mxu0 0
    %1243 = vmatpush2.bf16.msra.mxu0 0
    %1244 = vmatprep.mubr.bf16.mxu0 0
    %1245 = vmatmul.mubr.bf16.gmra.mxu0 %v1096
    %v1246 = vpop.f32.mrf.mxu0
    %v1247 = vadd.f32 %v1199, %v1246
    %v1248 = vpop.f32.mrf.mxu0
    %v1249 = vpop.f32.mrf.mxu0
    %v1250 = vadd.f32 %v1199, %v1249
    %v1251 = vpop.f32.mrf.mxu0
    %1252 = vdwg.mxu0
    %v1253 = vmul.f32 %v1190, %v22
    %v1254 = vmul.f32 %v1190, %v23
    %v1255 = vmul.f32 %v1190, %v24
    %v1256 = vmul.f32 %v1190, %v25
    %v1257 = vmul.f32 %v1193, %v22
    %v1258 = vmul.f32 %v1193, %v23
    %v1259 = vmul.f32 %v1193, %v24
    %v1260 = vmul.f32 %v1193, %v25
    %v1261 = vmul.f32 %v1247, %v22
    %v1262 = vmul.f32 %v1247, %v23
    %v1263 = vmul.f32 %v1247, %v24
    %v1264 = vmul.f32 %v1247, %v25
    %v1265 = vmul.f32 %v1250, %v22
    %v1266 = vmul.f32 %v1250, %v23
    %v1267 = vmul.f32 %v1250, %v24
    %v1268 = vmul.f32 %v1250, %v25
    %v1270 = vsel %vm171, %v1133, 0
    %v1273 = vsel %vm171, %v1253, 0
    %v1276 = vsel %vm171, %v1254, 0
    %v1279 = vsel %vm171, %v1255, 0
    %v1282 = vsel %vm171, %v1256, 0
    %1284 = vmatprep.subr.mxu0 0.0
    %1285 = vmatpush1.xpose.msra.mxu0 0.0
    %1286 = vmatprep.subr.mxu0 0.0
    %1287 = vmatpush1.xpose.msra.mxu0 0.0
    %1288 = vmatprep.subr.mxu0 0.0
    %1289 = vmatpush1.xpose.msra.mxu0 0.0
    %1290 = vmatprep.subr.mxu0 0.0
    %1291 = vmatpush1.xpose.msra.mxu0 0.0
    %1292 = vmatprep.subr.mxu0 0.0
    %1293 = vmatpush1.xpose.msra.mxu0 0.0
    %1294 = vmatprep.subr.mxu0 0.0
    %1295 = vmatpush1.xpose.msra.mxu0 0.0
    %1296 = vmatprep.subr.mxu0 0.0
    %1297 = vmatpush1.xpose.msra.mxu0 0.0
    %1298 = vmatprep.subr.mxu0 0.0
    %1299 = vmatpush1.xpose.msra.mxu0 0.0
    %1300 = vmatprep.subr.mxu0 0.0
    %1301 = vmatpush1.xpose.msra.mxu0 0.0
    %1302 = vmatprep.subr.mxu0 0.0
    %1303 = vmatpush1.xpose.msra.mxu0 0.0
    %1304 = vmatprep.subr.mxu0 0.0
    %1305 = vmatpush1.xpose.msra.mxu0 0.0
    %1306 = vmatprep.subr.mxu0 0.0
    %1307 = vmatpush1.xpose.msra.mxu0 0.0
    %1308 = vmatprep.subr.mxu0 0.0
    %1309 = vmatpush1.xpose.msra.mxu0 %v1282
    %1310 = vmatprep.subr.mxu0 0.0
    %1311 = vmatpush1.xpose.msra.mxu0 %v1279
    %1312 = vmatprep.subr.mxu0 0.0
    %1313 = vmatpush1.xpose.msra.mxu0 %v1276
    %1314 = vmatprep.subr.mxu0 0.0
    %1315 = vmatpush1.xpose.msra.mxu0 %v1273
    %1316 = vmatprep.subr.mxu0 0.0
    %1317 = vmatpush2.xpose.msra.mxu0 0.0
    %1318 = vmatprep.subr.mxu0 0.0
    %1319 = vmatpush2.xpose.msra.mxu0 0.0
    %1320 = vmatprep.subr.mxu0 0.0
    %1321 = vmatpush2.xpose.msra.mxu0 0.0
    %1322 = vmatprep.subr.mxu0 0.0
    %1323 = vmatpush2.xpose.msra.mxu0 0.0
    %1324 = vmatprep.subr.mxu0 0.0
    %1325 = vmatpush2.xpose.msra.mxu0 0.0
    %1326 = vmatprep.subr.mxu0 0.0
    %1327 = vmatpush2.xpose.msra.mxu0 0.0
    %1328 = vmatprep.subr.mxu0 0.0
    %1329 = vmatpush2.xpose.msra.mxu0 0.0
    %1330 = vmatprep.subr.mxu0 0.0
    %1331 = vmatpush2.xpose.msra.mxu0 0.0
    %1332 = vmatprep.subr.mxu0 0.0
    %1333 = vmatpush2.xpose.msra.mxu0 0.0
    %1334 = vmatprep.subr.mxu0 0.0
    %1335 = vmatpush2.xpose.msra.mxu0 0.0
    %1336 = vmatprep.subr.mxu0 0.0
    %1337 = vmatpush2.xpose.msra.mxu0 0.0
    %1338 = vmatprep.subr.mxu0 0.0
    %1339 = vmatpush2.xpose.msra.mxu0 0.0
    %1340 = vmatprep.subr.mxu0 0.0
    %1341 = vmatpush2.xpose.msra.mxu0 0.0
    %1342 = vmatprep.subr.mxu0 0.0
    %1343 = vmatpush2.xpose.msra.mxu0 0.0
    %1344 = vmatprep.subr.mxu0 0.0
    %1345 = vmatpush2.xpose.msra.mxu0 0.0
    %1346 = vmatprep.subr.mxu0 0.0
    %1347 = vmatpush2.xpose.msra.mxu0 0.0
    %1348 = vmatprep.mubr.f32.mxu0 0.0
    %1349 = vmatmul.mubr.f32.gmra.mxu0 %v1270
    %v1350 = vpop.f32.mrf.mxu0
    %v1351 = vadd.f32 0.0, %v1350
    %v1352 = vpop.f32.mrf.mxu0
    %1353 = vdwg.mxu0
    %v1355 = vsel %vm171, %v1136, 0
    %v1358 = vsel %vm171, %v1257, 0
    %v1361 = vsel %vm171, %v1258, 0
    %v1364 = vsel %vm171, %v1259, 0
    %v1367 = vsel %vm171, %v1260, 0
    %1369 = vmatprep.subr.mxu0 0.0
    %1370 = vmatpush1.xpose.msra.mxu0 0.0
    %1371 = vmatprep.subr.mxu0 0.0
    %1372 = vmatpush1.xpose.msra.mxu0 0.0
    %1373 = vmatprep.subr.mxu0 0.0
    %1374 = vmatpush1.xpose.msra.mxu0 0.0
    %1375 = vmatprep.subr.mxu0 0.0
    %1376 = vmatpush1.xpose.msra.mxu0 0.0
    %1377 = vmatprep.subr.mxu0 0.0
    %1378 = vmatpush1.xpose.msra.mxu0 0.0
    %1379 = vmatprep.subr.mxu0 0.0
    %1380 = vmatpush1.xpose.msra.mxu0 0.0
    %1381 = vmatprep.subr.mxu0 0.0
    %1382 = vmatpush1.xpose.msra.mxu0 0.0
    %1383 = vmatprep.subr.mxu0 0.0
    %1384 = vmatpush1.xpose.msra.mxu0 0.0
    %1385 = vmatprep.subr.mxu0 0.0
    %1386 = vmatpush1.xpose.msra.mxu0 0.0
    %1387 = vmatprep.subr.mxu0 0.0
    %1388 = vmatpush1.xpose.msra.mxu0 0.0
    %1389 = vmatprep.subr.mxu0 0.0
    %1390 = vmatpush1.xpose.msra.mxu0 0.0
    %1391 = vmatprep.subr.mxu0 0.0
    %1392 = vmatpush1.xpose.msra.mxu0 0.0
    %1393 = vmatprep.subr.mxu0 0.0
    %1394 = vmatpush1.xpose.msra.mxu0 %v1367
    %1395 = vmatprep.subr.mxu0 0.0
    %1396 = vmatpush1.xpose.msra.mxu0 %v1364
    %1397 = vmatprep.subr.mxu0 0.0
    %1398 = vmatpush1.xpose.msra.mxu0 %v1361
    %1399 = vmatprep.subr.mxu0 0.0
    %1400 = vmatpush1.xpose.msra.mxu0 %v1358
    %1401 = vmatprep.subr.mxu0 0.0
    %1402 = vmatpush2.xpose.msra.mxu0 0.0
    %1403 = vmatprep.subr.mxu0 0.0
    %1404 = vmatpush2.xpose.msra.mxu0 0.0
    %1405 = vmatprep.subr.mxu0 0.0
    %1406 = vmatpush2.xpose.msra.mxu0 0.0
    %1407 = vmatprep.subr.mxu0 0.0
    %1408 = vmatpush2.xpose.msra.mxu0 0.0
    %1409 = vmatprep.subr.mxu0 0.0
    %1410 = vmatpush2.xpose.msra.mxu0 0.0
    %1411 = vmatprep.subr.mxu0 0.0
    %1412 = vmatpush2.xpose.msra.mxu0 0.0
    %1413 = vmatprep.subr.mxu0 0.0
    %1414 = vmatpush2.xpose.msra.mxu0 0.0
    %1415 = vmatprep.subr.mxu0 0.0
    %1416 = vmatpush2.xpose.msra.mxu0 0.0
    %1417 = vmatprep.subr.mxu0 0.0
    %1418 = vmatpush2.xpose.msra.mxu0 0.0
    %1419 = vmatprep.subr.mxu0 0.0
    %1420 = vmatpush2.xpose.msra.mxu0 0.0
    %1421 = vmatprep.subr.mxu0 0.0
    %1422 = vmatpush2.xpose.msra.mxu0 0.0
    %1423 = vmatprep.subr.mxu0 0.0
    %1424 = vmatpush2.xpose.msra.mxu0 0.0
    %1425 = vmatprep.subr.mxu0 0.0
    %1426 = vmatpush2.xpose.msra.mxu0 0.0
    %1427 = vmatprep.subr.mxu0 0.0
    %1428 = vmatpush2.xpose.msra.mxu0 0.0
    %1429 = vmatprep.subr.mxu0 0.0
    %1430 = vmatpush2.xpose.msra.mxu0 0.0
    %1431 = vmatprep.subr.mxu0 0.0
    %1432 = vmatpush2.xpose.msra.mxu0 0.0
    %1433 = vmatprep.mubr.f32.mxu0 0.0
    %1434 = vmatmul.mubr.f32.gmra.mxu0 %v1355
    %v1435 = vpop.f32.mrf.mxu0
    %v1436 = vadd.f32 0.0, %v1435
    %v1437 = vpop.f32.mrf.mxu0
    %1438 = vdwg.mxu0
    %v1439 = vsel %vm171, %v1351, -inf
    %1440 = vmax.xlane.f32.xlu0 %v1439
    %v1441 = vpop.xlane.xlu0 %1440
    %v1442 = vsel %vm171, %v1436, -inf
    %1443 = vmax.xlane.f32.xlu0 %v1442
    %v1444 = vpop.xlane.xlu0 %1443
    %v1445 = vsub.f32 %v1351, %v1441
    %v1446 = vsub.f32 %v1436, %v1444
    %v1447 = vmul.f32 %v1445, 1.442695
    %v1448 = vpow.pop %v1447
    %v1449 = vmul.f32 %v1446, 1.442695
    %v1450 = vpow.pop %v1449
    %v1452 = vsel %vm171, %v1448, 0
    %v1455 = vsel %vm171, %v1450, 0
    %1457 = vmatprep.subr.mxu0 0.0
    %1458 = vmatpush1.msra.mxu0 0.0
    %1459 = vmatprep.subr.mxu0 0.0
    %1460 = vmatpush1.msra.mxu0 0.0
    %1461 = vmatprep.subr.mxu0 0.0
    %1462 = vmatpush1.msra.mxu0 0.0
    %1463 = vmatprep.subr.mxu0 0.0
    %1464 = vmatpush1.msra.mxu0 0.0
    %1465 = vmatprep.subr.mxu0 0.0
    %1466 = vmatpush1.msra.mxu0 0.0
    %1467 = vmatprep.subr.mxu0 0.0
    %1468 = vmatpush1.msra.mxu0 0.0
    %1469 = vmatprep.subr.mxu0 0.0
    %1470 = vmatpush1.msra.mxu0 0.0
    %1471 = vmatprep.subr.mxu0 0.0
    %1472 = vmatpush1.msra.mxu0 0.0
    %1473 = vmatprep.subr.mxu0 0.0
    %1474 = vmatpush1.msra.mxu0 0.0
    %1475 = vmatprep.subr.mxu0 0.0
    %1476 = vmatpush1.msra.mxu0 0.0
    %1477 = vmatprep.subr.mxu0 0.0
    %1478 = vmatpush1.msra.mxu0 0.0
    %1479 = vmatprep.subr.mxu0 0.0
    %1480 = vmatpush1.msra.mxu0 0.0
    %1481 = vmatprep.subr.mxu0 0.0
    %1482 = vmatpush1.msra.mxu0 %v29
    %1483 = vmatprep.subr.mxu0 0.0
    %1484 = vmatpush1.msra.mxu0 %v28
    %1485 = vmatprep.subr.mxu0 0.0
    %1486 = vmatpush1.msra.mxu0 %v27
    %1487 = vmatprep.subr.mxu0 0.0
    %1488 = vmatpush1.msra.mxu0 %v26
    %1489 = vmatprep.subr.mxu0 0.0
    %1490 = vmatpush2.msra.mxu0 0.0
    %1491 = vmatprep.subr.mxu0 0.0
    %1492 = vmatpush2.msra.mxu0 0.0
    %1493 = vmatprep.subr.mxu0 0.0
    %1494 = vmatpush2.msra.mxu0 0.0
    %1495 = vmatprep.subr.mxu0 0.0
    %1496 = vmatpush2.msra.mxu0 0.0
    %1497 = vmatprep.subr.mxu0 0.0
    %1498 = vmatpush2.msra.mxu0 0.0
    %1499 = vmatprep.subr.mxu0 0.0
    %1500 = vmatpush2.msra.mxu0 0.0
    %1501 = vmatprep.subr.mxu0 0.0
    %1502 = vmatpush2.msra.mxu0 0.0
    %1503 = vmatprep.subr.mxu0 0.0
    %1504 = vmatpush2.msra.mxu0 0.0
    %1505 = vmatprep.subr.mxu0 0.0
    %1506 = vmatpush2.msra.mxu0 0.0
    %1507 = vmatprep.subr.mxu0 0.0
    %1508 = vmatpush2.msra.mxu0 0.0
    %1509 = vmatprep.subr.mxu0 0.0
    %1510 = vmatpush2.msra.mxu0 0.0
    %1511 = vmatprep.subr.mxu0 0.0
    %1512 = vmatpush2.msra.mxu0 0.0
    %1513 = vmatprep.subr.mxu0 0.0
    %1514 = vmatpush2.msra.mxu0 0.0
    %1515 = vmatprep.subr.mxu0 0.0
    %1516 = vmatpush2.msra.mxu0 0.0
    %1517 = vmatprep.subr.mxu0 0.0
    %1518 = vmatpush2.msra.mxu0 0.0
    %1519 = vmatprep.subr.mxu0 0.0
    %1520 = vmatpush2.msra.mxu0 0.0
    %1521 = vmatprep.mubr.f32.mxu0 0.0
    %1522 = vmatmul.mubr.f32.gmra.mxu0 %v1452
    %v1523 = vpop.f32.mrf.mxu0
    %v1524 = vadd.f32 0.0, %v1523
    %v1525 = vpop.f32.mrf.mxu0
    %1526 = vmatprep.mubr.f32.mxu0 0.0
    %1527 = vmatmul.mubr.f32.gmra.mxu0 %v1455
    %v1528 = vpop.f32.mrf.mxu0
    %v1529 = vadd.f32 0.0, %v1528
    %v1530 = vpop.f32.mrf.mxu0
    %1531 = vdwg.mxu0
    %v1532 = vrcp.pop %v1524
    %v1533 = vrcp.pop %v1529
    %v1534 = vmul.f32 %v1448, %v1532
    %v1535 = vmul.f32 %v1450, %v1533
    %v1537 = vsel %vm171, %v1534, 0
    %1539 = vmatprep.subr.mxu0 0.0
    %1540 = vmatpush1.msra.mxu0 0.0
    %1541 = vmatprep.subr.mxu0 0.0
    %1542 = vmatpush1.msra.mxu0 0.0
    %1543 = vmatprep.subr.mxu0 0.0
    %1544 = vmatpush1.msra.mxu0 0.0
    %1545 = vmatprep.subr.mxu0 0.0
    %1546 = vmatpush1.msra.mxu0 0.0
    %1547 = vmatprep.subr.mxu0 0.0
    %1548 = vmatpush1.msra.mxu0 0.0
    %1549 = vmatprep.subr.mxu0 0.0
    %1550 = vmatpush1.msra.mxu0 0.0
    %1551 = vmatprep.subr.mxu0 0.0
    %1552 = vmatpush1.msra.mxu0 0.0
    %1553 = vmatprep.subr.mxu0 0.0
    %1554 = vmatpush1.msra.mxu0 0.0
    %1555 = vmatprep.subr.mxu0 0.0
    %1556 = vmatpush1.msra.mxu0 0.0
    %1557 = vmatprep.subr.mxu0 0.0
    %1558 = vmatpush1.msra.mxu0 0.0
    %1559 = vmatprep.subr.mxu0 0.0
    %1560 = vmatpush1.msra.mxu0 0.0
    %1561 = vmatprep.subr.mxu0 0.0
    %1562 = vmatpush1.msra.mxu0 0.0
    %1563 = vmatprep.subr.mxu0 0.0
    %1564 = vmatpush1.msra.mxu0 %v1264
    %1565 = vmatprep.subr.mxu0 0.0
    %1566 = vmatpush1.msra.mxu0 %v1263
    %1567 = vmatprep.subr.mxu0 0.0
    %1568 = vmatpush1.msra.mxu0 %v1262
    %1569 = vmatprep.subr.mxu0 0.0
    %1570 = vmatpush1.msra.mxu0 %v1261
    %1571 = vmatprep.subr.mxu0 0.0
    %1572 = vmatpush2.msra.mxu0 0.0
    %1573 = vmatprep.subr.mxu0 0.0
    %1574 = vmatpush2.msra.mxu0 0.0
    %1575 = vmatprep.subr.mxu0 0.0
    %1576 = vmatpush2.msra.mxu0 0.0
    %1577 = vmatprep.subr.mxu0 0.0
    %1578 = vmatpush2.msra.mxu0 0.0
    %1579 = vmatprep.subr.mxu0 0.0
    %1580 = vmatpush2.msra.mxu0 0.0
    %1581 = vmatprep.subr.mxu0 0.0
    %1582 = vmatpush2.msra.mxu0 0.0
    %1583 = vmatprep.subr.mxu0 0.0
    %1584 = vmatpush2.msra.mxu0 0.0
    %1585 = vmatprep.subr.mxu0 0.0
    %1586 = vmatpush2.msra.mxu0 0.0
    %1587 = vmatprep.subr.mxu0 0.0
    %1588 = vmatpush2.msra.mxu0 0.0
    %1589 = vmatprep.subr.mxu0 0.0
    %1590 = vmatpush2.msra.mxu0 0.0
    %1591 = vmatprep.subr.mxu0 0.0
    %1592 = vmatpush2.msra.mxu0 0.0
    %1593 = vmatprep.subr.mxu0 0.0
    %1594 = vmatpush2.msra.mxu0 0.0
    %1595 = vmatprep.subr.mxu0 0.0
    %1596 = vmatpush2.msra.mxu0 0.0
    %1597 = vmatprep.subr.mxu0 0.0
    %1598 = vmatpush2.msra.mxu0 0.0
    %1599 = vmatprep.subr.mxu0 0.0
    %1600 = vmatpush2.msra.mxu0 0.0
    %1601 = vmatprep.subr.mxu0 0.0
    %1602 = vmatpush2.msra.mxu0 0.0
    %1603 = vmatprep.mubr.f32.mxu0 0.0
    %1604 = vmatmul.mubr.f32.gmra.mxu0 %v1537
    %v1605 = vpop.f32.mrf.mxu0
    %v1606 = vadd.f32 0.0, %v1605
    %v1607 = vpop.f32.mrf.mxu0
    %1608 = vdwg.mxu0
    %v1610 = vsel %vm171, %v1535, 0
    %1612 = vmatprep.subr.mxu0 0.0
    %1613 = vmatpush1.msra.mxu0 0.0
    %1614 = vmatprep.subr.mxu0 0.0
    %1615 = vmatpush1.msra.mxu0 0.0
    %1616 = vmatprep.subr.mxu0 0.0
    %1617 = vmatpush1.msra.mxu0 0.0
    %1618 = vmatprep.subr.mxu0 0.0
    %1619 = vmatpush1.msra.mxu0 0.0
    %1620 = vmatprep.subr.mxu0 0.0
    %1621 = vmatpush1.msra.mxu0 0.0
    %1622 = vmatprep.subr.mxu0 0.0
    %1623 = vmatpush1.msra.mxu0 0.0
    %1624 = vmatprep.subr.mxu0 0.0
    %1625 = vmatpush1.msra.mxu0 0.0
    %1626 = vmatprep.subr.mxu0 0.0
    %1627 = vmatpush1.msra.mxu0 0.0
    %1628 = vmatprep.subr.mxu0 0.0
    %1629 = vmatpush1.msra.mxu0 0.0
    %1630 = vmatprep.subr.mxu0 0.0
    %1631 = vmatpush1.msra.mxu0 0.0
    %1632 = vmatprep.subr.mxu0 0.0
    %1633 = vmatpush1.msra.mxu0 0.0
    %1634 = vmatprep.subr.mxu0 0.0
    %1635 = vmatpush1.msra.mxu0 0.0
    %1636 = vmatprep.subr.mxu0 0.0
    %1637 = vmatpush1.msra.mxu0 %v1268
    %1638 = vmatprep.subr.mxu0 0.0
    %1639 = vmatpush1.msra.mxu0 %v1267
    %1640 = vmatprep.subr.mxu0 0.0
    %1641 = vmatpush1.msra.mxu0 %v1266
    %1642 = vmatprep.subr.mxu0 0.0
    %1643 = vmatpush1.msra.mxu0 %v1265
    %1644 = vmatprep.subr.mxu0 0.0
    %1645 = vmatpush2.msra.mxu0 0.0
    %1646 = vmatprep.subr.mxu0 0.0
    %1647 = vmatpush2.msra.mxu0 0.0
    %1648 = vmatprep.subr.mxu0 0.0
    %1649 = vmatpush2.msra.mxu0 0.0
    %1650 = vmatprep.subr.mxu0 0.0
    %1651 = vmatpush2.msra.mxu0 0.0
    %1652 = vmatprep.subr.mxu0 0.0
    %1653 = vmatpush2.msra.mxu0 0.0
    %1654 = vmatprep.subr.mxu0 0.0
    %1655 = vmatpush2.msra.mxu0 0.0
    %1656 = vmatprep.subr.mxu0 0.0
    %1657 = vmatpush2.msra.mxu0 0.0
    %1658 = vmatprep.subr.mxu0 0.0
    %1659 = vmatpush2.msra.mxu0 0.0
    %1660 = vmatprep.subr.mxu0 0.0
    %1661 = vmatpush2.msra.mxu0 0.0
    %1662 = vmatprep.subr.mxu0 0.0
    %1663 = vmatpush2.msra.mxu0 0.0
    %1664 = vmatprep.subr.mxu0 0.0
    %1665 = vmatpush2.msra.mxu0 0.0
    %1666 = vmatprep.subr.mxu0 0.0
    %1667 = vmatpush2.msra.mxu0 0.0
    %1668 = vmatprep.subr.mxu0 0.0
    %1669 = vmatpush2.msra.mxu0 0.0
    %1670 = vmatprep.subr.mxu0 0.0
    %1671 = vmatpush2.msra.mxu0 0.0
    %1672 = vmatprep.subr.mxu0 0.0
    %1673 = vmatpush2.msra.mxu0 0.0
    %1674 = vmatprep.subr.mxu0 0.0
    %1675 = vmatpush2.msra.mxu0 0.0
    %1676 = vmatprep.mubr.f32.mxu0 0.0
    %1677 = vmatmul.mubr.f32.gmra.mxu0 %v1610
    %v1678 = vpop.f32.mrf.mxu0
    %v1679 = vadd.f32 0.0, %v1678
    %v1680 = vpop.f32.mrf.mxu0
    %1681 = vdwg.mxu0
    %v1682 = vpack.c.bf16 %v1679, %v1606
    %v1683 = vlaneseq
    %v1684 = vshrl.u32 %v1683, 7
    %v1685 = vsub.s32 0, %v1684
    %v1686 = vrot.slane %v1071, %v1685
    %v1691 = vunpack.c.l.b16 %v1051
    %v1692 = vunpack.c.l.b16 %v1052
    %v1693 = vunpack.c.l.b16 %v1053
    %v1694 = vunpack.c.l.b16 %v1054
    %v1695 = vpack.c.b16 %v1692, %v1691
    %v1696 = vpack.c.b16 %v1694, %v1693
    %v1700 = vsel %vm171, %v1682, 0
    %1702 = vmatprep.subr.bf16.mxu0 0
    %1703 = vmatpush1.bf16.msra.mxu0 0
    %1704 = vmatprep.subr.bf16.mxu0 0
    %1705 = vmatpush1.bf16.msra.mxu0 0
    %1706 = vmatprep.subr.bf16.mxu0 0
    %1707 = vmatpush1.bf16.msra.mxu0 0
    %1708 = vmatprep.subr.bf16.mxu0 0
    %1709 = vmatpush1.bf16.msra.mxu0 0
    %1710 = vmatprep.subr.bf16.mxu0 0
    %1711 = vmatpush1.bf16.msra.mxu0 0
    %1712 = vmatprep.subr.bf16.mxu0 0
    %1713 = vmatpush1.bf16.msra.mxu0 0
    %1714 = vmatprep.subr.bf16.mxu0 0
    %1715 = vmatpush1.bf16.msra.mxu0 %v1696
    %1716 = vmatprep.subr.bf16.mxu0 0
    %1717 = vmatpush1.bf16.msra.mxu0 %v1695
    %1718 = vmatprep.subr.bf16.mxu0 0
    %1719 = vmatpush2.bf16.msra.mxu0 0
    %1720 = vmatprep.subr.bf16.mxu0 0
    %1721 = vmatpush2.bf16.msra.mxu0 0
    %1722 = vmatprep.subr.bf16.mxu0 0
    %1723 = vmatpush2.bf16.msra.mxu0 0
    %1724 = vmatprep.subr.bf16.mxu0 0
    %1725 = vmatpush2.bf16.msra.mxu0 0
    %1726 = vmatprep.subr.bf16.mxu0 0
    %1727 = vmatpush2.bf16.msra.mxu0 0
    %1728 = vmatprep.subr.bf16.mxu0 0
    %1729 = vmatpush2.bf16.msra.mxu0 0
    %1730 = vmatprep.subr.bf16.mxu0 0
    %1731 = vmatpush2.bf16.msra.mxu0 0
    %1732 = vmatprep.subr.bf16.mxu0 0
    %1733 = vmatpush2.bf16.msra.mxu0 0
    %1734 = vmatprep.mubr.bf16.mxu0 0
    %1735 = vmatmul.mubr.bf16.gmra.mxu0 %v1700
    %v1736 = vpop.f32.mrf.mxu0
    %v1737 = vadd.f32 %v1686, %v1736
    %v1738 = vpop.f32.mrf.mxu0
    %v1739 = vpop.f32.mrf.mxu0
    %v1740 = vadd.f32 %v1686, %v1739
    %v1741 = vpop.f32.mrf.mxu0
    %1742 = vdwg.mxu0
    %v1743 = vadd.f32 %v1036, %v1737
    %v1744 = vadd.f32 %v1037, %v1740
    %v1745 = vsel %vm171, %v1743, 0.0
    %1746 = vadd.xlane.f32.xlu0 %v1745
    %v1747 = vpop.xlane.xlu0 %1746
    %v1748 = vsel %vm171, %v1744, 0.0
    %1749 = vadd.xlane.f32.xlu0 %v1748
    %v1750 = vpop.xlane.xlu0 %1749
    %v1751 = vmul.f32 %v1747, %v828
    %v1752 = vmul.f32 %v1750, %v828
    %v1753 = vsub.f32 %v1743, %v1751
    %v1754 = vsub.f32 %v1744, %v1752
    %v1755 = vmul.f32 %v1753, %v1753
    %v1756 = vmul.f32 %v1754, %v1754
    %v1757 = vsel %vm171, %v1755, 0.0
    %1758 = vadd.xlane.f32.xlu0 %v1757
    %v1759 = vpop.xlane.xlu0 %1758
    %v1760 = vsel %vm171, %v1756, 0.0
    %1761 = vadd.xlane.f32.xlu0 %v1760
    %v1762 = vpop.xlane.xlu0 %1761
    %v1763 = vmul.f32 %v1759, %v828
    %v1764 = vmul.f32 %v1762, %v828
    %v1765 = vadd.f32 %v1763, 1e-05
    %v1766 = vadd.f32 %v1764, 1e-05
    %v1767 = vrsqrt.pop %v1765
    %v1768 = vrsqrt.pop %v1766
    %v1769 = vmul.f32 %v1753, %v1767
    %v1770 = vmul.f32 %v1754, %v1768
    %v1771 = vlaneseq
    %v1772 = vshrl.u32 %v1771, 7
    %v1773 = vsub.s32 0, %v1772
    %v1774 = vrot.slane %v1074, %v1773
    %v1775 = vmul.f32 %v1769, %v1774
    %v1776 = vmul.f32 %v1770, %v1774
    %v1777 = vlaneseq
    %v1778 = vshrl.u32 %v1777, 7
    %v1779 = vsub.s32 0, %v1778
    %v1780 = vrot.slane %v1075, %v1779
    %v1781 = vadd.f32 %v1775, %v1780
    %v1782 = vadd.f32 %v1776, %v1780
    %v1783 = vpack.c.bf16 %v1782, %v1781
    %v1784 = vlaneseq
    %v1785 = vshrl.u32 %v1784, 7
    %v1786 = vsub.s32 0, %v1785
    %v1787 = vrot.slane %v1072, %v1786
    %v1792 = vunpack.c.l.b16 %v1055
    %v1793 = vunpack.c.l.b16 %v1056
    %v1794 = vunpack.c.l.b16 %v1057
    %v1795 = vunpack.c.l.b16 %v1058
    %v1796 = vpack.c.b16 %v1793, %v1792
    %v1797 = vpack.c.b16 %v1795, %v1794
    %v1801 = vsel %vm171, %v1783, 0
    %1803 = vmatprep.subr.bf16.mxu0 0
    %1804 = vmatpush1.bf16.msra.mxu0 0
    %1805 = vmatprep.subr.bf16.mxu0 0
    %1806 = vmatpush1.bf16.msra.mxu0 0
    %1807 = vmatprep.subr.bf16.mxu0 0
    %1808 = vmatpush1.bf16.msra.mxu0 0
    %1809 = vmatprep.subr.bf16.mxu0 0
    %1810 = vmatpush1.bf16.msra.mxu0 0
    %1811 = vmatprep.subr.bf16.mxu0 0
    %1812 = vmatpush1.bf16.msra.mxu0 0
    %1813 = vmatprep.subr.bf16.mxu0 0
    %1814 = vmatpush1.bf16.msra.mxu0 0
    %1815 = vmatprep.subr.bf16.mxu0 0
    %1816 = vmatpush1.bf16.msra.mxu0 %v1797
    %1817 = vmatprep.subr.bf16.mxu0 0
    %1818 = vmatpush1.bf16.msra.mxu0 %v1796
    %1819 = vmatprep.subr.bf16.mxu0 0
    %1820 = vmatpush2.bf16.msra.mxu0 0
    %1821 = vmatprep.subr.bf16.mxu0 0
    %1822 = vmatpush2.bf16.msra.mxu0 0
    %1823 = vmatprep.subr.bf16.mxu0 0
    %1824 = vmatpush2.bf16.msra.mxu0 0
    %1825 = vmatprep.subr.bf16.mxu0 0
    %1826 = vmatpush2.bf16.msra.mxu0 0
    %1827 = vmatprep.subr.bf16.mxu0 0
    %1828 = vmatpush2.bf16.msra.mxu0 0
    %1829 = vmatprep.subr.bf16.mxu0 0
    %1830 = vmatpush2.bf16.msra.mxu0 0
    %1831 = vmatprep.subr.bf16.mxu0 0
    %1832 = vmatpush2.bf16.msra.mxu0 0
    %1833 = vmatprep.subr.bf16.mxu0 0
    %1834 = vmatpush2.bf16.msra.mxu0 0
    %1835 = vmatprep.mubr.bf16.mxu0 0
    %1836 = vmatmul.mubr.bf16.gmra.mxu0 %v1801
    %v1837 = vpop.f32.mrf.mxu0
    %v1838 = vadd.f32 %v1787, %v1837
    %v1839 = vpop.f32.mrf.mxu0
    %v1840 = vpop.f32.mrf.mxu0
    %v1841 = vadd.f32 %v1787, %v1840
    %v1842 = vpop.f32.mrf.mxu0
    %1843 = vdwg.mxu0
    %v1844 = vmax.f32 %v1838, 0.0
    %v1845 = vmax.f32 %v1841, 0.0
    %v1846 = vpack.c.bf16 %v1845, %v1844
    %v1847 = vlaneseq
    %v1848 = vshrl.u32 %v1847, 7
    %v1849 = vsub.s32 0, %v1848
    %v1850 = vrot.slane %v1073, %v1849
    %v1859 = vunpack.c.l.b16 %v1059
    %v1860 = vunpack.c.l.b16 %v1060
    %v1861 = vunpack.c.l.b16 %v1061
    %v1862 = vunpack.c.l.b16 %v1062
    %v1863 = vunpack.c.l.b16 %v1063
    %v1864 = vunpack.c.l.b16 %v1064
    %v1865 = vunpack.c.l.b16 %v1065
    %v1866 = vunpack.c.l.b16 %v1066
    %v1867 = vpack.c.b16 %v1860, %v1859
    %v1868 = vpack.c.b16 %v1862, %v1861
    %v1869 = vpack.c.b16 %v1864, %v1863
    %v1870 = vpack.c.b16 %v1866, %v1865
    %v1876 = vsel %vm953, %v1846, 0
    %1878 = vmatprep.subr.bf16.mxu0 0
    %1879 = vmatpush1.bf16.msra.mxu0 0
    %1880 = vmatprep.subr.bf16.mxu0 0
    %1881 = vmatpush1.bf16.msra.mxu0 0
    %1882 = vmatprep.subr.bf16.mxu0 0
    %1883 = vmatpush1.bf16.msra.mxu0 0
    %1884 = vmatprep.subr.bf16.mxu0 0
    %1885 = vmatpush1.bf16.msra.mxu0 0
    %1886 = vmatprep.subr.bf16.mxu0 0
    %1887 = vmatpush1.bf16.msra.mxu0 %v1870
    %1888 = vmatprep.subr.bf16.mxu0 0
    %1889 = vmatpush1.bf16.msra.mxu0 %v1869
    %1890 = vmatprep.subr.bf16.mxu0 0
    %1891 = vmatpush1.bf16.msra.mxu0 %v1868
    %1892 = vmatprep.subr.bf16.mxu0 0
    %1893 = vmatpush1.bf16.msra.mxu0 %v1867
    %1894 = vmatprep.subr.bf16.mxu0 0
    %1895 = vmatpush2.bf16.msra.mxu0 0
    %1896 = vmatprep.subr.bf16.mxu0 0
    %1897 = vmatpush2.bf16.msra.mxu0 0
    %1898 = vmatprep.subr.bf16.mxu0 0
    %1899 = vmatpush2.bf16.msra.mxu0 0
    %1900 = vmatprep.subr.bf16.mxu0 0
    %1901 = vmatpush2.bf16.msra.mxu0 0
    %1902 = vmatprep.subr.bf16.mxu0 0
    %1903 = vmatpush2.bf16.msra.mxu0 0
    %1904 = vmatprep.subr.bf16.mxu0 0
    %1905 = vmatpush2.bf16.msra.mxu0 0
    %1906 = vmatprep.subr.bf16.mxu0 0
    %1907 = vmatpush2.bf16.msra.mxu0 0
    %1908 = vmatprep.subr.bf16.mxu0 0
    %1909 = vmatpush2.bf16.msra.mxu0 0
    %1910 = vmatprep.mubr.bf16.mxu0 0
    %1911 = vmatmul.mubr.bf16.gmra.mxu0 %v1876
    %v1912 = vpop.f32.mrf.mxu0
    %v1913 = vadd.f32 %v1850, %v1912
    %v1914 = vpop.f32.mrf.mxu0
    %v1915 = vpop.f32.mrf.mxu0
    %v1916 = vadd.f32 %v1850, %v1915
    %v1917 = vpop.f32.mrf.mxu0
    %1918 = vdwg.mxu0
    %v1919 = vadd.f32 %v1781, %v1913
    %v1920 = vadd.f32 %v1782, %v1916
    %v1921 = vsel %vm171, %v1919, 0.0
    %1922 = vadd.xlane.f32.xlu0 %v1921
    %v1923 = vpop.xlane.xlu0 %1922
    %v1924 = vsel %vm171, %v1920, 0.0
    %1925 = vadd.xlane.f32.xlu0 %v1924
    %v1926 = vpop.xlane.xlu0 %1925
    %v1927 = vmul.f32 %v1923, %v828
    %v1928 = vmul.f32 %v1926, %v828
    %v1929 = vsub.f32 %v1919, %v1927
    %v1930 = vsub.f32 %v1920, %v1928
    %v1931 = vmul.f32 %v1929, %v1929
    %v1932 = vmul.f32 %v1930, %v1930
    %v1933 = vsel %vm171, %v1931, 0.0
    %1934 = vadd.xlane.f32.xlu0 %v1933
    %v1935 = vpop.xlane.xlu0 %1934
    %v1936 = vsel %vm171, %v1932, 0.0
    %1937 = vadd.xlane.f32.xlu0 %v1936
    %v1938 = vpop.xlane.xlu0 %1937
    %v1939 = vmul.f32 %v1935, %v828
    %v1940 = vmul.f32 %v1938, %v828
    %v1941 = vadd.f32 %v1939, 1e-05
    %v1942 = vadd.f32 %v1940, 1e-05
    %v1943 = vrsqrt.pop %v1941
    %v1944 = vrsqrt.pop %v1942
    %v1945 = vmul.f32 %v1929, %v1943
    %v1946 = vmul.f32 %v1930, %v1944
    %v1947 = vlaneseq
    %v1948 = vshrl.u32 %v1947, 7
    %v1949 = vsub.s32 0, %v1948
    %v1950 = vrot.slane %v1076, %v1949
    %v1951 = vmul.f32 %v1945, %v1950
    %v1952 = vmul.f32 %v1946, %v1950
    %v1953 = vlaneseq
    %v1954 = vshrl.u32 %v1953, 7
    %v1955 = vsub.s32 0, %v1954
    %v1956 = vrot.slane %v1077, %v1955
    %v1957 = vadd.f32 %v1951, %v1956
    %v1958 = vadd.f32 %v1952, %v1956
    %v1959 = vld [vmem:[%s4] sm:$0x1]
    %v1960 = vld [vmem:[%s4 + $0x1] sm:$0x1]
    %v1961 = vsel %vm171, %v1957, 0.0
    %1962 = vadd.xlane.f32.xlu0 %v1961
    %v1963 = vpop.xlane.xlu0 %1962
    %v1964 = vsel %vm171, %v1958, 0.0
    %1965 = vadd.xlane.f32.xlu0 %v1964
    %v1966 = vpop.xlane.xlu0 %1965
    %v1967 = vmul.f32 %v1963, %v828
    %v1968 = vmul.f32 %v1966, %v828
    %v1969 = vsub.f32 %v1957, %v1967
    %v1970 = vsub.f32 %v1958, %v1968
    %v1971 = vmul.f32 %v1969, %v1969
    %v1972 = vmul.f32 %v1970, %v1970
    %v1973 = vsel %vm171, %v1971, 0.0
    %1974 = vadd.xlane.f32.xlu0 %v1973
    %v1975 = vpop.xlane.xlu0 %1974
    %v1976 = vsel %vm171, %v1972, 0.0
    %1977 = vadd.xlane.f32.xlu0 %v1976
    %v1978 = vpop.xlane.xlu0 %1977
    %v1979 = vmul.f32 %v1975, %v828
    %v1980 = vmul.f32 %v1978, %v828
    %v1981 = vadd.f32 %v1979, 1e-05
    %v1982 = vadd.f32 %v1980, 1e-05
    %v1983 = vrsqrt.pop %v1981
    %v1984 = vrsqrt.pop %v1982
    %v1985 = vmul.f32 %v1969, %v1983
    %v1986 = vmul.f32 %v1970, %v1984
    %v1987 = vlaneseq
    %v1988 = vshrl.u32 %v1987, 7
    %v1989 = vsub.s32 0, %v1988
    %v1990 = vrot.slane %v1959, %v1989
    %v1991 = vmul.f32 %v1985, %v1990
    %v1992 = vmul.f32 %v1986, %v1990
    %v1993 = vlaneseq
    %v1994 = vshrl.u32 %v1993, 7
    %v1995 = vsub.s32 0, %v1994
    %v1996 = vrot.slane %v1960, %v1995
    %v1997 = vadd.f32 %v1991, %v1996
    %v1998 = vadd.f32 %v1992, %v1996
    %v1999 = vsel %vm171, %v1997, 0.0
    %v2000 = vrot.slane %v1999, 4
    %v2001 = vadd.f32 %v1999, %v2000
    %v2002 = vrot.slane %v2001, 2
    %v2003 = vadd.f32 %v2001, %v2002
    %v2004 = vrot.slane %v2003, 1
    %v2005 = vadd.f32 %v2003, %v2004
    %v2006 = vsel %vm171, %v1998, 0.0
    %v2007 = vrot.slane %v2006, 4
    %v2008 = vadd.f32 %v2006, %v2007
    %v2009 = vrot.slane %v2008, 2
    %v2010 = vadd.f32 %v2008, %v2009
    %v2011 = vrot.slane %v2010, 1
    %v2012 = vadd.f32 %v2010, %v2011
    %v2013 = vrcp.pop 8.0
    %v2014 = vmul.f32 %v2005, %v2013
    %v2015 = vmul.f32 %v2012, %v2013
    %v2016 = vld [vmem:[%s4 + $0x2] sm:$0x1]
    %v2017 = vld [vmem:[%s4 + $0x3] sm:$0x1]
    %vm2020 = vcmask 1041409
    %v2021 = vsel %vm2020, %v2015, %v2014
    %vm2023 = vcmask 254976
    %v2024 = vsel %vm2023, %v2021, 0.0
    %2025 = vadd.xlane.f32.xlu0 %v2024
    %v2026 = vpop.xlane.xlu0 %2025
    %v2027 = vmul.f32 %v2026, %v828
    %v2029 = vrot.slane %v2027, 1
    %v2032 = vsub.f32 %v2014, %v2027
    %v2033 = vsub.f32 %v2015, %v2029
    %v2034 = vmul.f32 %v2032, %v2032
    %v2035 = vmul.f32 %v2033, %v2033
    %v2038 = vrot.slane %v2035, 7
    %v2039 = vsel %vm2020, %v2038, %v2034
    %v2041 = vsel %vm2023, %v2039, 0.0
    %2042 = vadd.xlane.f32.xlu0 %v2041
    %v2043 = vpop.xlane.xlu0 %2042
    %v2044 = vmul.f32 %v2043, %v828
    %v2045 = vadd.f32 %v2044, 1e-05
    %v2046 = vrsqrt.pop %v2045
    %v2048 = vrot.slane %v2046, 1
    %v2051 = vmul.f32 %v2032, %v2046
    %v2052 = vmul.f32 %v2033, %v2048
    %v2053 = vlaneseq
    %v2054 = vshrl.u32 %v2053, 7
    %v2055 = vsub.s32 0, %v2054
    %v2056 = vrot.slane %v2016, %v2055
    %v2057 = vmul.f32 %v2051, %v2056
    %v2058 = vmul.f32 %v2052, %v2056
    %v2059 = vlaneseq
    %v2060 = vshrl.u32 %v2059, 7
    %v2061 = vsub.s32 0, %v2060
    %v2062 = vrot.slane %v2017, %v2061
    %v2063 = vadd.f32 %v2057, %v2062
    %v2064 = vadd.f32 %v2058, %v2062
    %v2065 = vld [vmem:[%s4 + $0x4] sm:$0x1]
    %v2066 = vld [vmem:[%s4 + $0x8] sm:$0xff]
    %v2067 = vld [vmem:[%s4 + $0x10] sm:$0xff]
    %v2068 = vld [vmem:[%s4 + $0x18] sm:$0xff]
    %v2069 = vld [vmem:[%s4 + $0x20] sm:$0xff]
    %v2070 = vlaneseq
    %v2071 = vshrl.u32 %v2070, 7
    %v2072 = vsub.s32 0, %v2071
    %v2073 = vrot.slane %v2065, %v2072
    %v2076 = vrot.slane %v2064, 7
    %v2077 = vsel %vm2020, %v2076, %v2063
    %v2078 = vsel %vm171, %v2077, 0
    %2080 = vmatprep.subr.mxu0 0.0
    %2081 = vmatpush1.msra.mxu0 0.0
    %2082 = vmatprep.subr.mxu0 0.0
    %2083 = vmatpush1.msra.mxu0 0.0
    %2084 = vmatprep.subr.mxu0 0.0
    %2085 = vmatpush1.msra.mxu0 0.0
    %2086 = vmatprep.subr.mxu0 0.0
    %2087 = vmatpush1.msra.mxu0 0.0
    %2088 = vmatprep.subr.mxu0 0.0
    %2089 = vmatpush1.msra.mxu0 0.0
    %2090 = vmatprep.subr.mxu0 0.0
    %2091 = vmatpush1.msra.mxu0 0.0
    %2092 = vmatprep.subr.mxu0 0.0
    %2093 = vmatpush1.msra.mxu0 0.0
    %2094 = vmatprep.subr.mxu0 0.0
    %2095 = vmatpush1.msra.mxu0 0.0
    %2096 = vmatprep.subr.mxu0 0.0
    %2097 = vmatpush1.msra.mxu0 0.0
    %2098 = vmatprep.subr.mxu0 0.0
    %2099 = vmatpush1.msra.mxu0 0.0
    %2100 = vmatprep.subr.mxu0 0.0
    %2101 = vmatpush1.msra.mxu0 0.0
    %2102 = vmatprep.subr.mxu0 0.0
    %2103 = vmatpush1.msra.mxu0 0.0
    %2104 = vmatprep.subr.mxu0 0.0
    %2105 = vmatpush1.msra.mxu0 %v2069
    %2106 = vmatprep.subr.mxu0 0.0
    %2107 = vmatpush1.msra.mxu0 %v2068
    %2108 = vmatprep.subr.mxu0 0.0
    %2109 = vmatpush1.msra.mxu0 %v2067
    %2110 = vmatprep.subr.mxu0 0.0
    %2111 = vmatpush1.msra.mxu0 %v2066
    %2112 = vmatprep.subr.mxu0 0.0
    %2113 = vmatpush2.msra.mxu0 0.0
    %2114 = vmatprep.subr.mxu0 0.0
    %2115 = vmatpush2.msra.mxu0 0.0
    %2116 = vmatprep.subr.mxu0 0.0
    %2117 = vmatpush2.msra.mxu0 0.0
    %2118 = vmatprep.subr.mxu0 0.0
    %2119 = vmatpush2.msra.mxu0 0.0
    %2120 = vmatprep.subr.mxu0 0.0
    %2121 = vmatpush2.msra.mxu0 0.0
    %2122 = vmatprep.subr.mxu0 0.0
    %2123 = vmatpush2.msra.mxu0 0.0
    %2124 = vmatprep.subr.mxu0 0.0
    %2125 = vmatpush2.msra.mxu0 0.0
    %2126 = vmatprep.subr.mxu0 0.0
    %2127 = vmatpush2.msra.mxu0 0.0
    %2128 = vmatprep.subr.mxu0 0.0
    %2129 = vmatpush2.msra.mxu0 0.0
    %2130 = vmatprep.subr.mxu0 0.0
    %2131 = vmatpush2.msra.mxu0 0.0
    %2132 = vmatprep.subr.mxu0 0.0
    %2133 = vmatpush2.msra.mxu0 0.0
    %2134 = vmatprep.subr.mxu0 0.0
    %2135 = vmatpush2.msra.mxu0 0.0
    %2136 = vmatprep.subr.mxu0 0.0
    %2137 = vmatpush2.msra.mxu0 0.0
    %2138 = vmatprep.subr.mxu0 0.0
    %2139 = vmatpush2.msra.mxu0 0.0
    %2140 = vmatprep.subr.mxu0 0.0
    %2141 = vmatpush2.msra.mxu0 0.0
    %2142 = vmatprep.subr.mxu0 0.0
    %2143 = vmatpush2.msra.mxu0 0.0
    %2144 = vmatprep.mubr.f32.mxu0 0.0
    %2145 = vmatmul.mubr.f32.gmra.mxu0 %v2078
    %v2146 = vpop.f32.mrf.mxu0
    %v2147 = vadd.f32 %v2073, %v2146
    %v2148 = vpop.f32.mrf.mxu0
    %2149 = vdwg.mxu0
    %v2150 = vtanh.pop %v2147
    %vm2151 = vcmask 58368
    %2152 = vst.msk [vmem:[#allocation2] sm:$0x3] %vm2151, %v2150
    // Predicated region
    $region22: #{tpu_custom_call.1} parent=1 // pred_check
      _
    $region23: #{tpu_custom_call.1} parent=1 // pred_check_branch
      %2154 = sbr.rel (0) target = $region25
    $region24: #{tpu_custom_call.1} parent=1 // pred_region
      %s2156 = ssub.s32 32, 32
      %2157 = vsyncadd [#allocation3], %s2156
      %s2159 = sshll.u32 [#allocation2], 4
      %s2160 = int_to_ptr.vmem [resolvable:$true] %s2159
      %2162 = dma.vmem_to_hbm [thread:$0]  %s2160, 32, %s5, [#allocation3]
    $region25: #{tpu_custom_call.1} parent=1 // pred_fallthru
      _
    // Predicated region
    $region26: #{tpu_custom_call.1} parent=1 // pred_check
      _
    $region27: #{tpu_custom_call.1} parent=1 // pred_check_branch
      %2164 = sbr.rel (0) target = $region29
    $region28: #{tpu_custom_call.1} parent=1 // pred_region
      %2165 = dma.done [#allocation3], 32
    $region29: #{tpu_custom_call.1} parent=1 // pred_fallthru
      _
    %2166 = vsyncpa [#allocation3], 1

</llo_original>
